<compile_context>
chip_gen: v7x
topology: tpu7x:2x2x1
jax: 0.10.0
libtpu: 0.0.40
codegen_flags: <defaults>
</compile_context>

<pallas_src>
import functools

import jax
import jax.numpy as jnp
from jax.experimental import pallas as pl
from jax.experimental.pallas import tpu as pltpu


def _pdhg_y_kernel(sigma_ref,                  # SMEM (1,)
                   x_ref,                      # (TK, in)   VMEM
                   y_ref,                      # (TM, in)   VMEM
                   a_ref,                      # (TM, TK)   VMEM
                   b_ref,                      # (TM, 1)    VMEM
                   wky_ref, bky_ref,           # Vky: (in, out), (1, out)
                   wfused_ref, bfused_ref,     # W' = Wvx - 2*Wwx, b' = bvx - 2*bwx
                   o_ref,                      # (TM, out)
                   acc_ref,                    # scratch (TM, out) f32
                   *, a_matmul_dtype):
    k = pl.program_id(1)

    @pl.when(k == 0)
    def _():
        acc_ref[...] = jnp.zeros_like(acc_ref)

    # Fused x-path:  xz = Vkx(x) - 2*Wkx(x) = x @ (Wvx - 2*Wwx) + (bvx - 2*bwx)
    xz = jnp.dot(x_ref[...], wfused_ref[...],
                 preferred_element_type=jnp.float32) + bfused_ref[...]

    # Single A matmul, accumulated over A's column tiles (the reduction axis).
    acc_ref[...] += jnp.dot(a_ref[...].astype(a_matmul_dtype),
                            xz.astype(a_matmul_dtype),
                            preferred_element_type=jnp.float32)

    @pl.when(k == pl.num_programs(1) - 1)
    def _():
        vy = jnp.dot(y_ref[...], wky_ref[...],
                     preferred_element_type=jnp.float32) + bky_ref[...]
        sigma = sigma_ref[0]
        # b is (TM, 1): broadcasts along lanes on the VPU (replaces b @ ones(1,out)).
        pre = vy - sigma * (b_ref[...] + acc_ref[...])
        o_ref[...] = jnp.maximum(pre, 0.0)          # ReLU


def _pick_tile(dim, pref):
    # Use the preferred tile if it evenly divides the dimension, else fall back
    # to the full dimension (always legal w.r.t. the (8,128) constraint).
    return pref if (pref <= dim and dim % pref == 0) else dim


def pdhg_layer_y_forward(params, x, y, A, b, *,
                         tm=256, tk=512, use_bf16_a_matmul=False):
    """tm/tk: row-tile of output/A and column-tile of A (reduction).  Defaults are
    sized for v6e/v7x; on v5e prefer 128-aligned tiles.  use_bf16_a_matmul=True
    runs the dominant A matmul in bf16 on v6e/v7x (A is a 0/1 mask)."""
    N, in_size = x.shape
    out_size = params["wky"].shape[1]

    TM = _pick_tile(N, tm)
    TK = _pick_tile(N, tk)
    grid = (N // TM, N // TK)

    # Algebraic fusion done once in the wrapper (tiny (in,out) subtract).
    w_fused = params["wvx"] - 2.0 * params["wwx"]
    b_fused = params["bvx"] - 2.0 * params["bwx"]

    a_matmul_dtype = jnp.bfloat16 if use_bf16_a_matmul else jnp.float32
    kernel = functools.partial(_pdhg_y_kernel, a_matmul_dtype=a_matmul_dtype)

    full2d = lambda shape: pl.BlockSpec(shape, lambda i, k: (0, 0))

    return pl.pallas_call(
        kernel,
        out_shape=jax.ShapeDtypeStruct((N, out_size), jnp.float32),
        grid_spec=pltpu.PrefetchScalarGridSpec(
            num_scalar_prefetch=0,
            grid=grid,
            in_specs=[
                pl.BlockSpec(memory_space=pltpu.MemorySpace.SMEM),   # sigma (1,)
                pl.BlockSpec((TK, in_size), lambda i, k: (k, 0)),    # x
                pl.BlockSpec((TM, in_size), lambda i, k: (i, 0)),    # y
                pl.BlockSpec((TM, TK),      lambda i, k: (i, k)),    # A
                pl.BlockSpec((TM, 1),       lambda i, k: (i, 0)),    # b
                full2d((in_size, out_size)),                         # Wky
                full2d((1, out_size)),                               # bky
                full2d((in_size, out_size)),                         # W' (fused)
                full2d((1, out_size)),                               # b' (fused)
            ],
            out_specs=pl.BlockSpec((TM, out_size), lambda i, k: (i, 0)),
            scratch_shapes=[pltpu.VMEM((TM, out_size), jnp.float32)],
        ),
        compiler_params=pltpu.CompilerParams(
            dimension_semantics=("parallel", "arbitrary"),
            vmem_limit_bytes=64 * 1024 * 1024,
        ),
    )(params["sigma"], x, y, A, b,
      params["wky"], params["bky"], w_fused, b_fused)


def init_params(key, in_size, out_size):
    ks = jax.random.split(key, 7)
    bound = 1.0 / jnp.sqrt(in_size)
    u = lambda k, s: jax.random.uniform(k, s, jnp.float32, -bound, bound)
    return {
        # Linear weights stored pre-transposed: (in, out)
        "wky": u(ks[0], (in_size, out_size)),
        "bky": u(ks[1], (1, out_size)),
        "wwx": u(ks[2], (in_size, out_size)),
        "bwx": u(ks[3], (1, out_size)),
        "wvx": u(ks[4], (in_size, out_size)),
        "bvx": u(ks[5], (1, out_size)),
        "sigma": jax.random.normal(ks[6], (1,), jnp.float32),
    }


def reference(params, x, y, A, b):
    # Straight transcription of the PyTorch forward (no fusion).
    one = jnp.ones((1, params["wky"].shape[1]), jnp.float32)
    vy = y @ params["wky"] + params["bky"]
    wx = x @ params["wwx"] + params["bwx"]
    vx = x @ params["wvx"] + params["bvx"]
    pre = vy - params["sigma"][0] * (b @ one - 2.0 * (A @ wx) + (A @ vx))
    return jnp.maximum(pre, 0.0)


if __name__ == "__main__":
    # Small but tiling-exercising shapes: 256 nodes -> 2x2 grid with tm=tk=128
    # (one parallel row axis + a real 2-step A-column reduction).
    N, in_size, out_size = 256, 32, 32

    key = jax.random.PRNGKey(0)
    kp, kx, ky, ka, kb = jax.random.split(key, 5)

    params = init_params(kp, in_size, out_size)
    x = jax.random.normal(kx, (N, in_size), jnp.float32)
    y = jax.random.normal(ky, (N, in_size), jnp.float32)
    # sparse-ish adjacency operator, densified
    A = (jax.random.uniform(ka, (N, N)) > 0.7).astype(jnp.float32)
    b = jax.random.normal(kb, (N, 1), jnp.float32)

    out = pdhg_layer_y_forward(params, x, y, A, b, tm=128, tk=128)
    out = jax.block_until_ready(out)

    ref = reference(params, x, y, A, b)
    assert out.shape == (N, out_size)
    assert jnp.allclose(out, ref, atol=1e-5, rtol=1e-5)

    print("KERNEL_OK")
</pallas_src>

<mosaic_0001>
module attributes {stable_mosaic.version = 11 : i64} {
  func.func @_pdhg_y_kernel(%arg0: i32, %arg1: i32, %arg2: memref<1xf32, #tpu.memory_space<smem>>, %arg3: memref<128x32xf32, #tpu.memory_space<vmem>>, %arg4: memref<128x32xf32, #tpu.memory_space<vmem>>, %arg5: memref<128x128xf32, #tpu.memory_space<vmem>>, %arg6: memref<128x1xf32, #tpu.memory_space<vmem>>, %arg7: memref<32x32xf32, #tpu.memory_space<vmem>>, %arg8: memref<1x32xf32, #tpu.memory_space<vmem>>, %arg9: memref<32x32xf32, #tpu.memory_space<vmem>>, %arg10: memref<1x32xf32, #tpu.memory_space<vmem>>, %arg11: memref<128x32xf32, #tpu.memory_space<vmem>>, %arg12: memref<128x32xf32, #tpu.memory_space<vmem>>) attributes {dimension_semantics = [#tpu.dimension_semantics<parallel>, #tpu.dimension_semantics<arbitrary>], iteration_bounds = array<i64: 2, 2>, scalar_prefetch = 0 : i64, scratch_operands = 1 : i64, tpu.core_type = #tpu.core_type<tc>, window_params = [{transform_indices = @transform_0, window_bounds = array<i64: 1>}, {transform_indices = @transform_1, window_bounds = array<i64: 128, 32>}, {transform_indices = @transform_2, window_bounds = array<i64: 128, 32>}, {transform_indices = @transform_3, window_bounds = array<i64: 128, 128>}, {transform_indices = @transform_4, window_bounds = array<i64: 128, 1>}, {pipeline_mode = #tpu.pipeline_mode<synchronous>, transform_indices = @transform_5, window_bounds = array<i64: 32, 32>}, {pipeline_mode = #tpu.pipeline_mode<synchronous>, transform_indices = @transform_6, window_bounds = array<i64: 1, 32>}, {pipeline_mode = #tpu.pipeline_mode<synchronous>, transform_indices = @transform_7, window_bounds = array<i64: 32, 32>}, {pipeline_mode = #tpu.pipeline_mode<synchronous>, transform_indices = @transform_8, window_bounds = array<i64: 1, 32>}, {transform_indices = @transform_9, window_bounds = array<i64: 128, 32>}]} {
    %c0_i32 = arith.constant 0 : i32
    %0 = arith.cmpi eq, %arg1, %c0_i32 : i32
    %1 = arith.extui %0 : i1 to i32
    %c0_i32_0 = arith.constant 0 : i32
    %2 = arith.cmpi ne, %1, %c0_i32_0 : i32
    scf.if %2 {
      %cst_14 = arith.constant 0.000000e+00 : f32
      %17 = vector.broadcast %cst_14 : f32 to vector<128x32xf32>
      %c0_15 = arith.constant 0 : index
      %c0_16 = arith.constant 0 : index
      %18 = vector.load %arg12[%c0_15, %c0_16] : memref<128x32xf32, #tpu.memory_space<vmem>>, vector<128x32xf32>
      tpu.vector_store %arg12[%c0_15, %c0_16], %17 {strides = array<i32>} : memref<128x32xf32, #tpu.memory_space<vmem>>, vector<128x32xf32>,
    } else {
    }
    %c0 = arith.constant 0 : index
    %c0_1 = arith.constant 0 : index
    %3 = vector.load %arg3[%c0, %c0_1] : memref<128x32xf32, #tpu.memory_space<vmem>>, vector<128x32xf32>
    %c0_2 = arith.constant 0 : index
    %c0_3 = arith.constant 0 : index
    %4 = vector.load %arg9[%c0_2, %c0_3] : memref<32x32xf32, #tpu.memory_space<vmem>>, vector<32x32xf32>
    %cst = arith.constant dense<0.000000e+00> : vector<128x32xf32>
    %5 = tpu.matmul %3, %4, %cst {dimension_numbers = #tpu.dot_dimension_numbers<[1], [0], [0], [1], [0, 0, 1, 1], [], []>} : vector<128x32xf32>, vector<32x32xf32>, vector<128x32xf32> -> vector<128x32xf32>
    %c0_4 = arith.constant 0 : index
    %c0_5 = arith.constant 0 : index
    %6 = vector.load %arg10[%c0_4, %c0_5] : memref<1x32xf32, #tpu.memory_space<vmem>>, vector<1x32xf32>
    %7 = vector.broadcast %6 : vector<1x32xf32> to vector<128x32xf32>
    %8 = arith.addf %5, %7 : vector<128x32xf32>
    %c0_6 = arith.constant 0 : index
    %c0_7 = arith.constant 0 : index
    %9 = vector.load %arg12[%c0_6, %c0_7] : memref<128x32xf32, #tpu.memory_space<vmem>>, vector<128x32xf32>
    %c0_8 = arith.constant 0 : index
    %c0_9 = arith.constant 0 : index
    %10 = vector.load %arg5[%c0_8, %c0_9] : memref<128x128xf32, #tpu.memory_space<vmem>>, vector<128x128xf32>
    %cst_10 = arith.constant dense<0.000000e+00> : vector<128x32xf32>
    %11 = tpu.matmul %10, %8, %cst_10 {dimension_numbers = #tpu.dot_dimension_numbers<[1], [0], [0], [1], [0, 0, 1, 1], [], []>} : vector<128x128xf32>, vector<128x32xf32>, vector<128x32xf32> -> vector<128x32xf32>
    %12 = arith.addf %9, %11 : vector<128x32xf32>
    %c0_11 = arith.constant 0 : index
    %c0_12 = arith.constant 0 : index
    %13 = vector.load %arg12[%c0_11, %c0_12] : memref<128x32xf32, #tpu.memory_space<vmem>>, vector<128x32xf32>
    tpu.vector_store %arg12[%c0_11, %c0_12], %12 {strides = array<i32>} : memref<128x32xf32, #tpu.memory_space<vmem>>, vector<128x32xf32>,
    %c1_i32 = arith.constant 1 : i32
    %14 = arith.cmpi eq, %arg1, %c1_i32 : i32
    %15 = arith.extui %14 : i1 to i32
    %c0_i32_13 = arith.constant 0 : i32
    %16 = arith.cmpi ne, %15, %c0_i32_13 : i32
    scf.if %16 {
      %c0_14 = arith.constant 0 : index
      %c0_15 = arith.constant 0 : index
      %17 = vector.load %arg4[%c0_14, %c0_15] : memref<128x32xf32, #tpu.memory_space<vmem>>, vector<128x32xf32>
      %c0_16 = arith.constant 0 : index
      %c0_17 = arith.constant 0 : index
      %18 = vector.load %arg7[%c0_16, %c0_17] : memref<32x32xf32, #tpu.memory_space<vmem>>, vector<32x32xf32>
      %cst_18 = arith.constant dense<0.000000e+00> : vector<128x32xf32>
      %19 = tpu.matmul %17, %18, %cst_18 {dimension_numbers = #tpu.dot_dimension_numbers<[1], [0], [0], [1], [0, 0, 1, 1], [], []>} : vector<128x32xf32>, vector<32x32xf32>, vector<128x32xf32> -> vector<128x32xf32>
      %c0_19 = arith.constant 0 : index
      %c0_20 = arith.constant 0 : index
      %20 = vector.load %arg8[%c0_19, %c0_20] : memref<1x32xf32, #tpu.memory_space<vmem>>, vector<1x32xf32>
      %21 = vector.broadcast %20 : vector<1x32xf32> to vector<128x32xf32>
      %22 = arith.addf %19, %21 : vector<128x32xf32>
      %c0_21 = arith.constant 0 : index
      %23 = memref.load %arg2[%c0_21] : memref<1xf32, #tpu.memory_space<smem>>
      %c0_22 = arith.constant 0 : index
      %c0_23 = arith.constant 0 : index
      %24 = vector.load %arg6[%c0_22, %c0_23] : memref<128x1xf32, #tpu.memory_space<vmem>>, vector<128x1xf32>
      %c0_24 = arith.constant 0 : index
      %c0_25 = arith.constant 0 : index
      %25 = vector.load %arg12[%c0_24, %c0_25] : memref<128x32xf32, #tpu.memory_space<vmem>>, vector<128x32xf32>
      %26 = vector.broadcast %24 : vector<128x1xf32> to vector<128x32xf32>
      %27 = arith.addf %26, %25 : vector<128x32xf32>
      %28 = vector.broadcast %23 : f32 to vector<128x32xf32>
      %29 = arith.mulf %28, %27 : vector<128x32xf32>
      %30 = arith.subf %22, %29 : vector<128x32xf32>
      %cst_26 = arith.constant 0.000000e+00 : f32
      %31 = vector.broadcast %cst_26 : f32 to vector<128x32xf32>
      %32 = arith.maximumf %30, %31 : vector<128x32xf32>
      %c0_27 = arith.constant 0 : index
      %c0_28 = arith.constant 0 : index
      %33 = vector.load %arg11[%c0_27, %c0_28] : memref<128x32xf32, #tpu.memory_space<vmem>>, vector<128x32xf32>
      tpu.vector_store %arg11[%c0_27, %c0_28], %32 {strides = array<i32>} : memref<128x32xf32, #tpu.memory_space<vmem>>, vector<128x32xf32>,
    } else {
    }
    return
  }
  func.func @transform_0(%arg0: i32, %arg1: i32) -> i32 {
    %c0_i32 = arith.constant 0 : i32
    %c0_i32_0 = arith.constant 0 : i32
    return %c0_i32 : i32
  }
  func.func @transform_1(%arg0: i32, %arg1: i32) -> (i32, i32) {
    %c0_i32 = arith.constant 0 : i32
    %c0_i32_0 = arith.constant 0 : i32
    return %arg1, %c0_i32 : i32, i32
  }
  func.func @transform_2(%arg0: i32, %arg1: i32) -> (i32, i32) {
    %c0_i32 = arith.constant 0 : i32
    %c0_i32_0 = arith.constant 0 : i32
    return %arg0, %c0_i32 : i32, i32
  }
  func.func @transform_3(%arg0: i32, %arg1: i32) -> (i32, i32) {
    %c0_i32 = arith.constant 0 : i32
    return %arg0, %arg1 : i32, i32
  }
  func.func @transform_4(%arg0: i32, %arg1: i32) -> (i32, i32) {
    %c0_i32 = arith.constant 0 : i32
    %c0_i32_0 = arith.constant 0 : i32
    return %arg0, %c0_i32 : i32, i32
  }
  func.func @transform_5(%arg0: i32, %arg1: i32) -> (i32, i32) {
    %c0_i32 = arith.constant 0 : i32
    %c0_i32_0 = arith.constant 0 : i32
    %c0_i32_1 = arith.constant 0 : i32
    return %c0_i32, %c0_i32_0 : i32, i32
  }
  func.func @transform_6(%arg0: i32, %arg1: i32) -> (i32, i32) {
    %c0_i32 = arith.constant 0 : i32
    %c0_i32_0 = arith.constant 0 : i32
    %c0_i32_1 = arith.constant 0 : i32
    return %c0_i32, %c0_i32_0 : i32, i32
  }
  func.func @transform_7(%arg0: i32, %arg1: i32) -> (i32, i32) {
    %c0_i32 = arith.constant 0 : i32
    %c0_i32_0 = arith.constant 0 : i32
    %c0_i32_1 = arith.constant 0 : i32
    return %c0_i32, %c0_i32_0 : i32, i32
  }
  func.func @transform_8(%arg0: i32, %arg1: i32) -> (i32, i32) {
    %c0_i32 = arith.constant 0 : i32
    %c0_i32_0 = arith.constant 0 : i32
    %c0_i32_1 = arith.constant 0 : i32
    return %c0_i32, %c0_i32_0 : i32, i32
  }
  func.func @transform_9(%arg0: i32, %arg1: i32) -> (i32, i32) {
    %c0_i32 = arith.constant 0 : i32
    %c0_i32_0 = arith.constant 0 : i32
    return %arg0, %c0_i32 : i32, i32
  }
}

</mosaic_0001>

<llo_original>
// kernel: tpu_custom_call.1
$region0: #{tpu_custom_call.1}
  #allocation0 [shape = 'u32[]', space=smem, size = 0x4, offset = 0x4, fixed_abs, tag = 'smem constant byte address 0x4 - core index']
  #allocation1 [shape = 'u32[144,128]{1,0:T(1,128)}', space=vmem, size = 0x12000, scoped, tag = 'internal scratch']
  #allocation2 [shape = 'f32[128,32]{1,0:T(8,128)}', space=vmem, size = 0x10000, scoped, tag = 'scratch operand']
  #allocation3 [shape = 'f32[1]{0:T(128)S(6)}', space=smem, size = 0x200, scoped, tag = 'scoped memory for tpu_custom_call.1']
  %s0 = inlined_call_operand.<no memory space> [shape: f32[1], index: 0, kind: input, shape index: {}]
  %s1 = inlined_call_operand.hbm [shape: f32[256,32], index: 1, kind: input, shape index: {}]
  %s2 = inlined_call_operand.hbm [shape: f32[256,32], index: 2, kind: input, shape index: {}]
  %s3 = inlined_call_operand.hbm [shape: f32[256,256], index: 3, kind: input, shape index: {}]
  %s4 = inlined_call_operand.hbm [shape: f32[256,1], index: 4, kind: input, shape index: {}]
  %s5 = inlined_call_operand.hbm [shape: f32[32,32], index: 5, kind: input, shape index: {}]
  %s6 = inlined_call_operand.hbm [shape: f32[1,32], index: 6, kind: input, shape index: {}]
  %s7 = inlined_call_operand.hbm [shape: f32[32,32], index: 7, kind: input, shape index: {}]
  %s8 = inlined_call_operand.hbm [shape: f32[1,32], index: 8, kind: input, shape index: {}]
  %s9 = inlined_call_operand.hbm [shape: f32[256,32], index: 9, kind: output, shape index: {}]
  %s10 = sld [smem:[#allocation0]]
  $region109: #{tpu_custom_call.1} parent=0
    _
  %s12 = ssub.s32 1, %s10
  %s13 = scalar_select 0, %s12, %s10
  %14 = sst [smem:[#allocation3]] %s0
  $region1: #{tpu_custom_call.1} parent=0
    #allocation4 [shape = 'u8[131072]{0}', space=vmem, size = 0x20000, scoped, tag = 'input window, operand 1']
    #allocation5 [shape = 's32[2]{0}', space=sflag, size = 0x8, scoped, tag = 'scoped memory for tpu_custom_call.1']
    #allocation6 [shape = 's32[2]{0}', space=sflag, size = 0x8, scoped, tag = 'scoped memory for tpu_custom_call.1']
    #allocation7 [shape = 'u8[131072]{0}', space=vmem, size = 0x20000, scoped, tag = 'input window, operand 2']
    #allocation8 [shape = 's32[2]{0}', space=sflag, size = 0x8, scoped, tag = 'scoped memory for tpu_custom_call.1']
    #allocation9 [shape = 'u8[131072]{0}', space=vmem, size = 0x20000, scoped, tag = 'input window, operand 3']
    #allocation10 [shape = 'u8[131072]{0}', space=vmem, size = 0x20000, scoped, tag = 'input window, operand 4']
    #allocation11 [shape = 's32[2]{0}', space=sflag, size = 0x8, scoped, tag = 'scoped memory for tpu_custom_call.1']
    #allocation12 [shape = 'u8[16384]{0}', space=vmem, size = 0x4000, scoped, tag = 'input window, operand 5, single buffered']
    #allocation13 [shape = 'u8[512]{0}', space=vmem, size = 0x400, scoped, tag = 'input window, operand 6, single buffered']
    #allocation14 [shape = 's32[1]{0}', space=sflag, size = 0x4, scoped, tag = 'scoped memory for tpu_custom_call.1']
    #allocation15 [shape = 'u8[16384]{0}', space=vmem, size = 0x4000, scoped, tag = 'input window, operand 7, single buffered']
    #allocation16 [shape = 'u8[512]{0}', space=vmem, size = 0x400, scoped, tag = 'input window, operand 8, single buffered']
    #allocation17 [shape = 's32[1]{0}', space=sflag, size = 0x4, scoped, tag = 'scoped memory for tpu_custom_call.1']
    #allocation18 [shape = 'u8[131072]{0}', space=vmem, size = 0x20000, scoped, tag = 'output window, operand 0']
    %15 = vsyncpa [#allocation5], 0
    %s16 = scalar_lea.sflag [#allocation5], 1
    %17 = vsyncpa %s16, 0
    %18 = vsyncpa [#allocation8], 0
    %s19 = scalar_lea.sflag [#allocation8], 1
    %20 = vsyncpa %s19, 0
    %21 = vsyncpa [#allocation11], 0
    %s22 = scalar_lea.sflag [#allocation11], 1
    %23 = vsyncpa %s22, 0
    %24 = vsyncpa [#allocation14], 0
    %25 = vsyncpa [#allocation17], 0
    %26 = vsyncpa [#allocation6], 0
    %s27 = scalar_lea.sflag [#allocation6], 1
    %28 = vsyncpa %s27, 0
    loop: start=0, step=1, limit=6
    $region2: #{tpu_custom_call.1} parent=1 // loop_pre_header
      _
    $region3: #{tpu_custom_call.1} parent=1 // loop_header
      %s30 = sphi 0, %s34
      %p31 = scmp.ge.s32.totalorder %s30, 6
      %s37 = sphi 0, %s49
      %s38 = sphi 0, %s45
      %s39 = sphi 0, %s37
      %s40 = sphi 0, %s38
      %s41 = sphi 0, %s39
      %s42 = sphi 0, %s40
      %s50 = sphi 0, %s50
      %s52 = sphi 0, %s50
      %s53 = sphi 0, %s52
      %s67 = sphi 0, %s53
      %s73 = sphi 0, %s75
      %s76 = sphi 0, %s73
      %s77 = sphi 0, %s76
      %s93 = sphi 0, %s77
      %s99 = sphi 0, %s101
      %s102 = sphi 0, %s99
      %s103 = sphi 0, %s102
      %s119 = sphi 0, %s103
      %s127 = sphi 0, %s129
      %s130 = sphi 0, %s127
      %s131 = sphi 0, %s130
      %s147 = sphi 0, %s131
      %s153 = sphi 0, %s155
      %s156 = sphi 0, %s153
      %s157 = sphi 0, %s156
      %s173 = sphi 0, %s157
      %s177 = sphi 0, %s177
      %s179 = sphi 0, %s177
      %s180 = sphi 0, %s179
      %s194 = sphi 0, %s180
      %s198 = sphi 0, %s198
      %s200 = sphi 0, %s198
      %s201 = sphi 0, %s200
      %s215 = sphi 0, %s201
      %s219 = sphi 0, %s219
      %s221 = sphi 0, %s219
      %s222 = sphi 0, %s221
      %s236 = sphi 0, %s222
      %s240 = sphi 0, %s240
      %s242 = sphi 0, %s240
      %s243 = sphi 0, %s242
      %s257 = sphi 0, %s243
      %s263 = sphi 0, %s265
      %s266 = sphi 0, %s263
      %s267 = sphi 0, %s266
      %s283 = sphi 0, %s267
    $region4: #{tpu_custom_call.1} parent=1 // loop_header_branch
      %33 = sbr.rel (%p31) target = $region8
    $region5: #{tpu_custom_call.1} parent=1 // loop_body
      %s35 = ssub.s32 %s30, 1
      %s36 = ssub.s32 %s30, 2
      %s43 = sadd.s32 1, %s38
      %p44 = scmp.ge.s32.totalorder %s43, 2
      %s45 = scalar_select %p44, 0, %s43
      %s46 = sadd.s32 1, %s37
      %s47 = scalar_select %p44, %s46, %s37
      %p48 = scmp.ge.s32.totalorder %s47, 2
      %s49 = scalar_select %p48, 0, %s47
      %s51 = sadd.s32 %s50, 1
      %p54 = scmp.eq.s32.totalorder %s30, 3
      %p55 = scmp.ne.s32.totalorder %s50, %s52
      %p56 = scmp.eq.s32.totalorder %s30, 0
      %p57 = por %p55, %p56
      %p58 = scmp.ne.s32.totalorder %s50, %s52
      %p59 = scmp.eq.s32.totalorder %s35, 3
      %p60 = por %p58, %p59
      %p61 = scmp.ne.s32.totalorder %s52, %s53
      %p62 = scmp.eq.s32.totalorder %s35, 0
      %p63 = por %p61, %p62
      %p64 = scmp.ne.s32.totalorder %s52, %s53
      %p65 = scmp.eq.s32.totalorder %s36, 3
      %p66 = por %p64, %p65
      %p68 = scmp.ne.s32.totalorder %s53, %s67
      %p69 = scmp.eq.s32.totalorder %s36, 0
      %p70 = por %p68, %p69
      %s71 = ssub.s32 %s38, %s45
      %p72 = scmp.eq.s32.totalorder %s71, 0
      %s74 = sadd.s32 %s73, 1
      %s75 = scalar_select %p72, %s73, %s74
      %p78 = pneg %p72
      %p79 = scmp.eq.s32.totalorder %s30, 3
      %p80 = por %p78, %p79
      %p81 = scmp.ne.s32.totalorder %s73, %s76
      %p82 = scmp.eq.s32.totalorder %s30, 0
      %p83 = por %p81, %p82
      %p84 = scmp.ne.s32.totalorder %s73, %s76
      %p85 = scmp.eq.s32.totalorder %s35, 3
      %p86 = por %p84, %p85
      %p87 = scmp.ne.s32.totalorder %s76, %s77
      %p88 = scmp.eq.s32.totalorder %s35, 0
      %p89 = por %p87, %p88
      %p90 = scmp.ne.s32.totalorder %s76, %s77
      %p91 = scmp.eq.s32.totalorder %s36, 3
      %p92 = por %p90, %p91
      %p94 = scmp.ne.s32.totalorder %s77, %s93
      %p95 = scmp.eq.s32.totalorder %s36, 0
      %p96 = por %p94, %p95
      %s97 = ssub.s32 %s37, %s49
      %p98 = scmp.eq.s32.totalorder %s97, 0
      %s100 = sadd.s32 %s99, 1
      %s101 = scalar_select %p98, %s99, %s100
      %p104 = pneg %p98
      %p105 = scmp.eq.s32.totalorder %s30, 3
      %p106 = por %p104, %p105
      %p107 = scmp.ne.s32.totalorder %s99, %s102
      %p108 = scmp.eq.s32.totalorder %s30, 0
      %p109 = por %p107, %p108
      %p110 = scmp.ne.s32.totalorder %s99, %s102
      %p111 = scmp.eq.s32.totalorder %s35, 3
      %p112 = por %p110, %p111
      %p113 = scmp.ne.s32.totalorder %s102, %s103
      %p114 = scmp.eq.s32.totalorder %s35, 0
      %p115 = por %p113, %p114
      %p116 = scmp.ne.s32.totalorder %s102, %s103
      %p117 = scmp.eq.s32.totalorder %s36, 3
      %p118 = por %p116, %p117
      %p120 = scmp.ne.s32.totalorder %s103, %s119
      %p121 = scmp.eq.s32.totalorder %s36, 0
      %p122 = por %p120, %p121
      %s123 = ssub.s32 %s37, %s49
      %s124 = ssub.s32 %s38, %s45
      %s125 = sor.u32 %s123, %s124
      %p126 = scmp.eq.s32.totalorder %s125, 0
      %s128 = sadd.s32 %s127, 1
      %s129 = scalar_select %p126, %s127, %s128
      %p132 = pneg %p126
      %p133 = scmp.eq.s32.totalorder %s30, 3
      %p134 = por %p132, %p133
      %p135 = scmp.ne.s32.totalorder %s127, %s130
      %p136 = scmp.eq.s32.totalorder %s30, 0
      %p137 = por %p135, %p136
      %p138 = scmp.ne.s32.totalorder %s127, %s130
      %p139 = scmp.eq.s32.totalorder %s35, 3
      %p140 = por %p138, %p139
      %p141 = scmp.ne.s32.totalorder %s130, %s131
      %p142 = scmp.eq.s32.totalorder %s35, 0
      %p143 = por %p141, %p142
      %p144 = scmp.ne.s32.totalorder %s130, %s131
      %p145 = scmp.eq.s32.totalorder %s36, 3
      %p146 = por %p144, %p145
      %p148 = scmp.ne.s32.totalorder %s131, %s147
      %p149 = scmp.eq.s32.totalorder %s36, 0
      %p150 = por %p148, %p149
      %s151 = ssub.s32 %s37, %s49
      %p152 = scmp.eq.s32.totalorder %s151, 0
      %s154 = sadd.s32 %s153, 1
      %s155 = scalar_select %p152, %s153, %s154
      %p158 = pneg %p152
      %p159 = scmp.eq.s32.totalorder %s30, 3
      %p160 = por %p158, %p159
      %p161 = scmp.ne.s32.totalorder %s153, %s156
      %p162 = scmp.eq.s32.totalorder %s30, 0
      %p163 = por %p161, %p162
      %p164 = scmp.ne.s32.totalorder %s153, %s156
      %p165 = scmp.eq.s32.totalorder %s35, 3
      %p166 = por %p164, %p165
      %p167 = scmp.ne.s32.totalorder %s156, %s157
      %p168 = scmp.eq.s32.totalorder %s35, 0
      %p169 = por %p167, %p168
      %p170 = scmp.ne.s32.totalorder %s156, %s157
      %p171 = scmp.eq.s32.totalorder %s36, 3
      %p172 = por %p170, %p171
      %p174 = scmp.ne.s32.totalorder %s157, %s173
      %p175 = scmp.eq.s32.totalorder %s36, 0
      %p176 = por %p174, %p175
      %s178 = sadd.s32 %s177, 1
      %p181 = scmp.eq.s32.totalorder %s30, 3
      %p182 = scmp.ne.s32.totalorder %s177, %s179
      %p183 = scmp.eq.s32.totalorder %s30, 0
      %p184 = por %p182, %p183
      %p185 = scmp.ne.s32.totalorder %s177, %s179
      %p186 = scmp.eq.s32.totalorder %s35, 3
      %p187 = por %p185, %p186
      %p188 = scmp.ne.s32.totalorder %s179, %s180
      %p189 = scmp.eq.s32.totalorder %s35, 0
      %p190 = por %p188, %p189
      %p191 = scmp.ne.s32.totalorder %s179, %s180
      %p192 = scmp.eq.s32.totalorder %s36, 3
      %p193 = por %p191, %p192
      %p195 = scmp.ne.s32.totalorder %s180, %s194
      %p196 = scmp.eq.s32.totalorder %s36, 0
      %p197 = por %p195, %p196
      %s199 = sadd.s32 %s198, 1
      %p202 = scmp.eq.s32.totalorder %s30, 3
      %p203 = scmp.ne.s32.totalorder %s198, %s200
      %p204 = scmp.eq.s32.totalorder %s30, 0
      %p205 = por %p203, %p204
      %p206 = scmp.ne.s32.totalorder %s198, %s200
      %p207 = scmp.eq.s32.totalorder %s35, 3
      %p208 = por %p206, %p207
      %p209 = scmp.ne.s32.totalorder %s200, %s201
      %p210 = scmp.eq.s32.totalorder %s35, 0
      %p211 = por %p209, %p210
      %p212 = scmp.ne.s32.totalorder %s200, %s201
      %p213 = scmp.eq.s32.totalorder %s36, 3
      %p214 = por %p212, %p213
      %p216 = scmp.ne.s32.totalorder %s201, %s215
      %p217 = scmp.eq.s32.totalorder %s36, 0
      %p218 = por %p216, %p217
      %s220 = sadd.s32 %s219, 1
      %p223 = scmp.eq.s32.totalorder %s30, 3
      %p224 = scmp.ne.s32.totalorder %s219, %s221
      %p225 = scmp.eq.s32.totalorder %s30, 0
      %p226 = por %p224, %p225
      %p227 = scmp.ne.s32.totalorder %s219, %s221
      %p228 = scmp.eq.s32.totalorder %s35, 3
      %p229 = por %p227, %p228
      %p230 = scmp.ne.s32.totalorder %s221, %s222
      %p231 = scmp.eq.s32.totalorder %s35, 0
      %p232 = por %p230, %p231
      %p233 = scmp.ne.s32.totalorder %s221, %s222
      %p234 = scmp.eq.s32.totalorder %s36, 3
      %p235 = por %p233, %p234
      %p237 = scmp.ne.s32.totalorder %s222, %s236
      %p238 = scmp.eq.s32.totalorder %s36, 0
      %p239 = por %p237, %p238
      %s241 = sadd.s32 %s240, 1
      %p244 = scmp.eq.s32.totalorder %s30, 3
      %p245 = scmp.ne.s32.totalorder %s240, %s242
      %p246 = scmp.eq.s32.totalorder %s30, 0
      %p247 = por %p245, %p246
      %p248 = scmp.ne.s32.totalorder %s240, %s242
      %p249 = scmp.eq.s32.totalorder %s35, 3
      %p250 = por %p248, %p249
      %p251 = scmp.ne.s32.totalorder %s242, %s243
      %p252 = scmp.eq.s32.totalorder %s35, 0
      %p253 = por %p251, %p252
      %p254 = scmp.ne.s32.totalorder %s242, %s243
      %p255 = scmp.eq.s32.totalorder %s36, 3
      %p256 = por %p254, %p255
      %p258 = scmp.ne.s32.totalorder %s243, %s257
      %p259 = scmp.eq.s32.totalorder %s36, 0
      %p260 = por %p258, %p259
      %s261 = ssub.s32 %s37, %s49
      %p262 = scmp.eq.s32.totalorder %s261, 0
      %s264 = sadd.s32 %s263, 1
      %s265 = scalar_select %p262, %s263, %s264
      %p268 = pneg %p262
      %p269 = scmp.eq.s32.totalorder %s30, 3
      %p270 = por %p268, %p269
      %p271 = scmp.ne.s32.totalorder %s263, %s266
      %p272 = scmp.eq.s32.totalorder %s30, 0
      %p273 = por %p271, %p272
      %p274 = scmp.ne.s32.totalorder %s263, %s266
      %p275 = scmp.eq.s32.totalorder %s35, 3
      %p276 = por %p274, %p275
      %p277 = scmp.ne.s32.totalorder %s266, %s267
      %p278 = scmp.eq.s32.totalorder %s35, 0
      %p279 = por %p277, %p278
      %p280 = scmp.ne.s32.totalorder %s266, %s267
      %p281 = scmp.eq.s32.totalorder %s36, 3
      %p282 = por %p280, %p281
      %p284 = scmp.ne.s32.totalorder %s267, %s283
      %p285 = scmp.eq.s32.totalorder %s36, 0
      %p286 = por %p284, %p285
      %p287 = scmp.le.s32.totalorder 1, %s30
      %p288 = scmp.lt.s32.totalorder %s30, 5
      %p289 = pnand %p287, %p288
      %p290 = pneg %p289
      // Predicated region
      $region9: #{tpu_custom_call.1} parent=5 // pred_check
        _
      $region10: #{tpu_custom_call.1} parent=5 // pred_check_branch
        %292 = sbr.rel (%p289) target = $region12
      $region11: #{tpu_custom_call.1} parent=5 // pred_region
        %s293 = ssub.s32 %s30, 1
        // Predicated region
        $region13: #{tpu_custom_call.1} parent=11 // pred_check
          %p294 = pneg %p63
        $region14: #{tpu_custom_call.1} parent=11 // pred_check_branch
          %296 = sbr.rel (%p294) target = $region16
        $region15: #{tpu_custom_call.1} parent=11 // pred_region
          _
        $region16: #{tpu_custom_call.1} parent=11 // pred_fallthru
          _
        // Predicated region
        $region17: #{tpu_custom_call.1} parent=11 // pred_check
          %p297 = pneg %p190
        $region18: #{tpu_custom_call.1} parent=11 // pred_check_branch
          %299 = sbr.rel (%p297) target = $region20
        $region19: #{tpu_custom_call.1} parent=11 // pred_region
          %s301 = ssub.s32 512, 512
          %302 = vsyncadd [#allocation11], %s301
          %s303 = sshll.u32 [#allocation12], 4
          %s304 = int_to_ptr.vmem [resolvable:$true] %s303
          %309 = dma.hbm_to_vmem [thread:$0]  %s5, 512, %s304, [#allocation11], 128, 128, 8
        $region20: #{tpu_custom_call.1} parent=11 // pred_fallthru
          _
        // Predicated region
        $region21: #{tpu_custom_call.1} parent=11 // pred_check
          %p310 = pneg %p211
        $region22: #{tpu_custom_call.1} parent=11 // pred_check_branch
          %312 = sbr.rel (%p310) target = $region24
        $region23: #{tpu_custom_call.1} parent=11 // pred_region
          %s314 = ssub.s32 16, 16
          %315 = vsyncadd [#allocation14], %s314
          %s317 = sshll.u32 [#allocation13], 4
          %s318 = int_to_ptr.vmem [resolvable:$true] %s317
          %320 = dma.hbm_to_vmem [thread:$0]  %s6, 16, %s318, [#allocation14]
        $region24: #{tpu_custom_call.1} parent=11 // pred_fallthru
          _
        // Predicated region
        $region25: #{tpu_custom_call.1} parent=11 // pred_check
          %p321 = pneg %p232
        $region26: #{tpu_custom_call.1} parent=11 // pred_check_branch
          %323 = sbr.rel (%p321) target = $region28
        $region27: #{tpu_custom_call.1} parent=11 // pred_region
          %s325 = ssub.s32 512, 512
          %326 = vsyncadd [#allocation14], %s325
          %s327 = sshll.u32 [#allocation15], 4
          %s328 = int_to_ptr.vmem [resolvable:$true] %s327
          %333 = dma.hbm_to_vmem [thread:$0]  %s7, 512, %s328, [#allocation14], 128, 128, 8
        $region28: #{tpu_custom_call.1} parent=11 // pred_fallthru
          _
        // Predicated region
        $region29: #{tpu_custom_call.1} parent=11 // pred_check
          %p334 = pneg %p253
        $region30: #{tpu_custom_call.1} parent=11 // pred_check_branch
          %336 = sbr.rel (%p334) target = $region32
        $region31: #{tpu_custom_call.1} parent=11 // pred_region
          %s338 = ssub.s32 16, 16
          %339 = vsyncadd [#allocation17], %s338
          %s341 = sshll.u32 [#allocation16], 4
          %s342 = int_to_ptr.vmem [resolvable:$true] %s341
          %344 = dma.hbm_to_vmem [thread:$0]  %s8, 16, %s342, [#allocation17]
        $region32: #{tpu_custom_call.1} parent=11 // pred_fallthru
          _
      $region12: #{tpu_custom_call.1} parent=5 // pred_fallthru
        _
      %p345 = scmp.lt.s32.totalorder %s30, 4
      // Predicated region
      $region33: #{tpu_custom_call.1} parent=5 // pred_check
        %p346 = pneg %p345
      $region34: #{tpu_custom_call.1} parent=5 // pred_check_branch
        %348 = sbr.rel (%p346) target = $region36
      $region35: #{tpu_custom_call.1} parent=5 // pred_region
        // Predicated region
        $region37: #{tpu_custom_call.1} parent=35 // pred_check
          %p349 = pneg %p83
        $region38: #{tpu_custom_call.1} parent=35 // pred_check_branch
          %351 = sbr.rel (%p349) target = $region40
        $region39: #{tpu_custom_call.1} parent=35 // pred_region
          %s352 = sand.u32 %s73, 1
          %s353 = scalar_lea.sflag [#allocation5], %s352
          %s354 = sand.u32 %s73, 1
          %s355 = smul.addr %s354, 128
          %s356 = scalar_lea.vmem [#allocation4], %s355
          %s357 = smul.u32 16, %s38
          %s359 = ssub.s32 2048, 2048
          %360 = vsyncadd %s353, %s359
          %s361 = smul.addr %s357, 128
          %s362 = scalar_lea.hbm %s1, %s361
          %s363 = sshll.u32 %s356, 4
          %s364 = int_to_ptr.vmem [resolvable:$true] %s363
          %369 = dma.hbm_to_vmem [thread:$0]  %s362, 2048, %s364, %s353, 128, 128, 8
        $region40: #{tpu_custom_call.1} parent=35 // pred_fallthru
          _
        // Predicated region
        $region41: #{tpu_custom_call.1} parent=35 // pred_check
          %p370 = pneg %p109
        $region42: #{tpu_custom_call.1} parent=35 // pred_check_branch
          %372 = sbr.rel (%p370) target = $region44
        $region43: #{tpu_custom_call.1} parent=35 // pred_region
          %s373 = sand.u32 %s30, 1
          %s374 = scalar_lea.sflag [#allocation8], %s373
          %s375 = sand.u32 %s99, 1
          %s376 = smul.addr %s375, 128
          %s377 = scalar_lea.vmem [#allocation7], %s376
          %s378 = smul.u32 16, %s37
          %s380 = ssub.s32 2048, 2048
          %381 = vsyncadd %s374, %s380
          %s382 = smul.addr %s378, 128
          %s383 = scalar_lea.hbm %s2, %s382
          %s384 = sshll.u32 %s377, 4
          %s385 = int_to_ptr.vmem [resolvable:$true] %s384
          %390 = dma.hbm_to_vmem [thread:$0]  %s383, 2048, %s385, %s374, 128, 128, 8
        $region44: #{tpu_custom_call.1} parent=35 // pred_fallthru
          _
        // Predicated region
        $region45: #{tpu_custom_call.1} parent=35 // pred_check
          %p391 = pneg %p137
        $region46: #{tpu_custom_call.1} parent=35 // pred_check_branch
          %393 = sbr.rel (%p391) target = $region48
        $region47: #{tpu_custom_call.1} parent=35 // pred_region
          %s394 = sand.u32 %s30, 1
          %s395 = scalar_lea.sflag [#allocation8], %s394
          %s396 = sand.u32 %s127, 1
          %s397 = smul.addr %s396, 128
          %s398 = scalar_lea.vmem [#allocation9], %s397
          %s399 = smul.u32 16, %s37
          %s401 = ssub.s32 2048, 2048
          %402 = vsyncadd %s395, %s401
          %s403 = smul.addr %s399, 2
          %s404 = sadd.s32 %s38, %s403
          %s405 = smul.addr %s404, 128
          %s406 = scalar_lea.hbm %s3, %s405
          %s407 = sshll.u32 %s398, 4
          %s408 = int_to_ptr.vmem [resolvable:$true] %s407
          %413 = dma.hbm_to_vmem [thread:$0]  %s406, 2048, %s408, %s395, 256, 128, 8
        $region48: #{tpu_custom_call.1} parent=35 // pred_fallthru
          _
        // Predicated region
        $region49: #{tpu_custom_call.1} parent=35 // pred_check
          %p414 = pneg %p163
        $region50: #{tpu_custom_call.1} parent=35 // pred_check_branch
          %416 = sbr.rel (%p414) target = $region52
        $region51: #{tpu_custom_call.1} parent=35 // pred_region
          %s417 = sand.u32 %s30, 1
          %s418 = scalar_lea.sflag [#allocation11], %s417
          %s419 = sand.u32 %s153, 1
          %s420 = smul.addr %s419, 128
          %s421 = scalar_lea.vmem [#allocation10], %s420
          %s422 = smul.u32 16, %s37
          %s424 = ssub.s32 2048, 2048
          %425 = vsyncadd %s418, %s424
          %s426 = smul.addr %s422, 128
          %s427 = scalar_lea.hbm %s4, %s426
          %s428 = sshll.u32 %s421, 4
          %s429 = int_to_ptr.vmem [resolvable:$true] %s428
          %434 = dma.hbm_to_vmem [thread:$0]  %s427, 2048, %s429, %s418, 128, 128, 8
        $region52: #{tpu_custom_call.1} parent=35 // pred_fallthru
          _
      $region36: #{tpu_custom_call.1} parent=5 // pred_fallthru
        _
      %p435 = scmp.le.s32.totalorder 1, %s30
      %p436 = scmp.lt.s32.totalorder %s30, 5
      %p437 = pnand %p435, %p436
      %p438 = pneg %p437
      // Predicated region
      $region53: #{tpu_custom_call.1} parent=5 // pred_check
        _
      $region54: #{tpu_custom_call.1} parent=5 // pred_check_branch
        %440 = sbr.rel (%p437) target = $region56
      $region55: #{tpu_custom_call.1} parent=5 // pred_region
        %s441 = ssub.s32 %s30, 1
        %s442 = sand.u32 %s76, 1
        %s443 = scalar_lea.sflag [#allocation5], %s442
        %s444 = sand.u32 %s76, 1
        %s445 = smul.addr %s444, 128
        %s446 = scalar_lea.vmem [#allocation4], %s445
        // Predicated region
        $region57: #{tpu_custom_call.1} parent=55 // pred_check
          %p447 = pneg %p89
        $region58: #{tpu_custom_call.1} parent=55 // pred_check_branch
          %449 = sbr.rel (%p447) target = $region60
        $region59: #{tpu_custom_call.1} parent=55 // pred_region
          %450 = dma.done %s443, 2048
        $region60: #{tpu_custom_call.1} parent=55 // pred_fallthru
          _
        %s451 = sand.u32 %s35, 1
        %s452 = scalar_lea.sflag [#allocation8], %s451
        %s453 = sand.u32 %s102, 1
        %s454 = smul.addr %s453, 128
        %s455 = scalar_lea.vmem [#allocation7], %s454
        // Predicated region
        $region61: #{tpu_custom_call.1} parent=55 // pred_check
          %p456 = pneg %p115
        $region62: #{tpu_custom_call.1} parent=55 // pred_check_branch
          %458 = sbr.rel (%p456) target = $region64
        $region63: #{tpu_custom_call.1} parent=55 // pred_region
          %459 = dma.done %s452, 2048
        $region64: #{tpu_custom_call.1} parent=55 // pred_fallthru
          _
        %s460 = sand.u32 %s35, 1
        %s461 = scalar_lea.sflag [#allocation8], %s460
        %s462 = sand.u32 %s130, 1
        %s463 = smul.addr %s462, 128
        %s464 = scalar_lea.vmem [#allocation9], %s463
        // Predicated region
        $region65: #{tpu_custom_call.1} parent=55 // pred_check
          %p465 = pneg %p143
        $region66: #{tpu_custom_call.1} parent=55 // pred_check_branch
          %467 = sbr.rel (%p465) target = $region68
        $region67: #{tpu_custom_call.1} parent=55 // pred_region
          %468 = dma.done %s461, 2048
        $region68: #{tpu_custom_call.1} parent=55 // pred_fallthru
          _
        %s469 = sand.u32 %s35, 1
        %s470 = scalar_lea.sflag [#allocation11], %s469
        %s471 = sand.u32 %s156, 1
        %s472 = smul.addr %s471, 128
        %s473 = scalar_lea.vmem [#allocation10], %s472
        // Predicated region
        $region69: #{tpu_custom_call.1} parent=55 // pred_check
          %p474 = pneg %p169
        $region70: #{tpu_custom_call.1} parent=55 // pred_check_branch
          %476 = sbr.rel (%p474) target = $region72
        $region71: #{tpu_custom_call.1} parent=55 // pred_region
          %477 = dma.done %s470, 2048
        $region72: #{tpu_custom_call.1} parent=55 // pred_fallthru
          _
        // Predicated region
        $region73: #{tpu_custom_call.1} parent=55 // pred_check
          %p478 = pneg %p190
        $region74: #{tpu_custom_call.1} parent=55 // pred_check_branch
          %480 = sbr.rel (%p478) target = $region76
        $region75: #{tpu_custom_call.1} parent=55 // pred_region
          %481 = dma.done [#allocation11], 512
        $region76: #{tpu_custom_call.1} parent=55 // pred_fallthru
          _
        // Predicated region
        $region77: #{tpu_custom_call.1} parent=55 // pred_check
          %p482 = pneg %p211
        $region78: #{tpu_custom_call.1} parent=55 // pred_check_branch
          %484 = sbr.rel (%p482) target = $region80
        $region79: #{tpu_custom_call.1} parent=55 // pred_region
          %485 = dma.done [#allocation14], 16
        $region80: #{tpu_custom_call.1} parent=55 // pred_fallthru
          _
        // Predicated region
        $region81: #{tpu_custom_call.1} parent=55 // pred_check
          %p486 = pneg %p232
        $region82: #{tpu_custom_call.1} parent=55 // pred_check_branch
          %488 = sbr.rel (%p486) target = $region84
        $region83: #{tpu_custom_call.1} parent=55 // pred_region
          %489 = dma.done [#allocation14], 512
        $region84: #{tpu_custom_call.1} parent=55 // pred_fallthru
          _
        // Predicated region
        $region85: #{tpu_custom_call.1} parent=55 // pred_check
          %p490 = pneg %p253
        $region86: #{tpu_custom_call.1} parent=55 // pred_check_branch
          %492 = sbr.rel (%p490) target = $region88
        $region87: #{tpu_custom_call.1} parent=55 // pred_region
          %493 = dma.done [#allocation17], 16
        $region88: #{tpu_custom_call.1} parent=55 // pred_fallthru
          _
        %p494 = pneg %p63
        %p495 = pneg %p60
        %s496 = sand.u32 %s76, 1
        %s497 = scalar_lea.sflag [#allocation5], %s496
        %s498 = sand.u32 %s76, 1
        %s499 = smul.addr %s498, 128
        %s500 = scalar_lea.vmem [#allocation4], %s499
        %p501 = pneg %p89
        %p502 = pneg %p86
        %s503 = sand.u32 %s35, 1
        %s504 = scalar_lea.sflag [#allocation8], %s503
        %s505 = sand.u32 %s102, 1
        %s506 = smul.addr %s505, 128
        %s507 = scalar_lea.vmem [#allocation7], %s506
        %p508 = pneg %p115
        %p509 = pneg %p112
        %s510 = sand.u32 %s35, 1
        %s511 = scalar_lea.sflag [#allocation8], %s510
        %s512 = sand.u32 %s130, 1
        %s513 = smul.addr %s512, 128
        %s514 = scalar_lea.vmem [#allocation9], %s513
        %p515 = pneg %p143
        %p516 = pneg %p140
        %s517 = sand.u32 %s35, 1
        %s518 = scalar_lea.sflag [#allocation11], %s517
        %s519 = sand.u32 %s156, 1
        %s520 = smul.addr %s519, 128
        %s521 = scalar_lea.vmem [#allocation10], %s520
        %p522 = pneg %p169
        %p523 = pneg %p166
        %p524 = pneg %p190
        %p525 = pneg %p187
        %p526 = pneg %p211
        %p527 = pneg %p208
        %p528 = pneg %p232
        %p529 = pneg %p229
        %p530 = pneg %p253
        %p531 = pneg %p250
        %p532 = pneg %p279
        %p533 = pneg %p276
        %s534 = sand.u32 %s266, 1
        %s535 = scalar_lea.sflag [#allocation6], %s534
        %s536 = sand.u32 %s266, 1
        %s537 = smul.addr %s536, 128
        %s538 = scalar_lea.vmem [#allocation18], %s537
        %s539 = smul.u32 16, %s40
        %s540 = smul.u32 16, %s39
        %s541 = smul.u32 16, %s39
        %s542 = smul.u32 16, %s39
        %s543 = smul.u32 16, %s39
        %p544 = scmp.eq.s32.totalorder %s40, 0
        // Predicated region
        $region89: #{tpu_custom_call.1} parent=55 // pred_check
          %p545 = pneg %p544
        $region90: #{tpu_custom_call.1} parent=55 // pred_check_branch
          %547 = sbr.rel (%p545) target = $region92
        $region91: #{tpu_custom_call.1} parent=55 // pred_region
          %vm548 = vcmask 261120
          %549 = vst.msk [vmem:[#allocation2] sm:$0xff] %vm548, 0.0
          %550 = vst.msk [vmem:[#allocation2 + $0x8] sm:$0xff] %vm548, 0.0
          %551 = vst.msk [vmem:[#allocation2 + $0x10] sm:$0xff] %vm548, 0.0
          %552 = vst.msk [vmem:[#allocation2 + $0x18] sm:$0xff] %vm548, 0.0
          %553 = vst.msk [vmem:[#allocation2 + $0x20] sm:$0xff] %vm548, 0.0
          %554 = vst.msk [vmem:[#allocation2 + $0x28] sm:$0xff] %vm548, 0.0
          %555 = vst.msk [vmem:[#allocation2 + $0x30] sm:$0xff] %vm548, 0.0
          %556 = vst.msk [vmem:[#allocation2 + $0x38] sm:$0xff] %vm548, 0.0
          %557 = vst.msk [vmem:[#allocation2 + $0x40] sm:$0xff] %vm548, 0.0
          %558 = vst.msk [vmem:[#allocation2 + $0x48] sm:$0xff] %vm548, 0.0
          %559 = vst.msk [vmem:[#allocation2 + $0x50] sm:$0xff] %vm548, 0.0
          %560 = vst.msk [vmem:[#allocation2 + $0x58] sm:$0xff] %vm548, 0.0
          %561 = vst.msk [vmem:[#allocation2 + $0x60] sm:$0xff] %vm548, 0.0
          %562 = vst.msk [vmem:[#allocation2 + $0x68] sm:$0xff] %vm548, 0.0
          %563 = vst.msk [vmem:[#allocation2 + $0x70] sm:$0xff] %vm548, 0.0
          %564 = vst.msk [vmem:[#allocation2 + $0x78] sm:$0xff] %vm548, 0.0
        $region92: #{tpu_custom_call.1} parent=55 // pred_fallthru
          _
        %v565 = vld [vmem:[%s446] sm:$0xff]
        %v566 = vld [vmem:[%s446 + $0x8] sm:$0xff]
        %v567 = vld [vmem:[%s446 + $0x10] sm:$0xff]
        %v568 = vld [vmem:[%s446 + $0x18] sm:$0xff]
        %v569 = vld [vmem:[%s446 + $0x20] sm:$0xff]
        %v570 = vld [vmem:[%s446 + $0x28] sm:$0xff]
        %v571 = vld [vmem:[%s446 + $0x30] sm:$0xff]
        %v572 = vld [vmem:[%s446 + $0x38] sm:$0xff]
        %v573 = vld [vmem:[%s446 + $0x40] sm:$0xff]
        %v574 = vld [vmem:[%s446 + $0x48] sm:$0xff]
        %v575 = vld [vmem:[%s446 + $0x50] sm:$0xff]
        %v576 = vld [vmem:[%s446 + $0x58] sm:$0xff]
        %v577 = vld [vmem:[%s446 + $0x60] sm:$0xff]
        %v578 = vld [vmem:[%s446 + $0x68] sm:$0xff]
        %v579 = vld [vmem:[%s446 + $0x70] sm:$0xff]
        %v580 = vld [vmem:[%s446 + $0x78] sm:$0xff]
        %v581 = vld [vmem:[#allocation15] sm:$0xff]
        %v582 = vld [vmem:[#allocation15 + $0x8] sm:$0xff]
        %v583 = vld [vmem:[#allocation15 + $0x10] sm:$0xff]
        %v584 = vld [vmem:[#allocation15 + $0x18] sm:$0xff]
        %v585 = vld [vmem:[#allocation16] sm:$0x1]
        %v587 = vlaneseq
        %v588 = vshrl.u32 %v587, 7
        %v589 = vsub.s32 0, %v588
        %v590 = vrot.slane %v585, %v589
        %vm592 = vcmask 261120
        %v594 = vsel %vm592, %v565, 0
        %v597 = vsel %vm592, %v566, 0
        %v600 = vsel %vm592, %v567, 0
        %v603 = vsel %vm592, %v568, 0
        %v606 = vsel %vm592, %v569, 0
        %v609 = vsel %vm592, %v570, 0
        %v612 = vsel %vm592, %v571, 0
        %v615 = vsel %vm592, %v572, 0
        %v618 = vsel %vm592, %v573, 0
        %v621 = vsel %vm592, %v574, 0
        %v624 = vsel %vm592, %v575, 0
        %v627 = vsel %vm592, %v576, 0
        %v630 = vsel %vm592, %v577, 0
        %v633 = vsel %vm592, %v578, 0
        %v636 = vsel %vm592, %v579, 0
        %v639 = vsel %vm592, %v580, 0
        %641 = vmatprep.subr.mxu0 0.0
        %642 = vmatpush1.msra.mxu0 %v581
        %643 = vmatprep.subr.mxu0 0.0
        %644 = vmatpush1.msra.mxu0 %v582
        %645 = vmatprep.subr.mxu0 0.0
        %646 = vmatpush1.msra.mxu0 %v583
        %647 = vmatprep.subr.mxu0 0.0
        %648 = vmatpush1.msra.mxu0 %v584
        %649 = vmatprep.subr.mxu0 0.0
        %650 = vmatpush1.msra.mxu0 0.0
        %651 = vmatprep.subr.mxu0 0.0
        %652 = vmatpush1.msra.mxu0 0.0
        %653 = vmatprep.subr.mxu0 0.0
        %654 = vmatpush1.msra.mxu0 0.0
        %655 = vmatprep.subr.mxu0 0.0
        %656 = vmatpush1.msra.mxu0 0.0
        %657 = vmatprep.subr.mxu0 0.0
        %658 = vmatpush1.msra.mxu0 0.0
        %659 = vmatprep.subr.mxu0 0.0
        %660 = vmatpush1.msra.mxu0 0.0
        %661 = vmatprep.subr.mxu0 0.0
        %662 = vmatpush1.msra.mxu0 0.0
        %663 = vmatprep.subr.mxu0 0.0
        %664 = vmatpush1.msra.mxu0 0.0
        %665 = vmatprep.subr.mxu0 0.0
        %666 = vmatpush1.msra.mxu0 0.0
        %667 = vmatprep.subr.mxu0 0.0
        %668 = vmatpush1.msra.mxu0 0.0
        %669 = vmatprep.subr.mxu0 0.0
        %670 = vmatpush1.msra.mxu0 0.0
        %671 = vmatprep.subr.mxu0 0.0
        %672 = vmatpush1.msra.mxu0 0.0
        %673 = vmatprep.subr.mxu0 0.0
        %674 = vmatpush1.msra.mxu0 0.0
        %675 = vmatprep.subr.mxu0 0.0
        %676 = vmatpush1.msra.mxu0 0.0
        %677 = vmatprep.subr.mxu0 0.0
        %678 = vmatpush1.msra.mxu0 0.0
        %679 = vmatprep.subr.mxu0 0.0
        %680 = vmatpush1.msra.mxu0 0.0
        %681 = vmatprep.subr.mxu0 0.0
        %682 = vmatpush1.msra.mxu0 0.0
        %683 = vmatprep.subr.mxu0 0.0
        %684 = vmatpush1.msra.mxu0 0.0
        %685 = vmatprep.subr.mxu0 0.0
        %686 = vmatpush1.msra.mxu0 0.0
        %687 = vmatprep.subr.mxu0 0.0
        %688 = vmatpush1.msra.mxu0 0.0
        %689 = vmatprep.subr.mxu0 0.0
        %690 = vmatpush1.msra.mxu0 0.0
        %691 = vmatprep.subr.mxu0 0.0
        %692 = vmatpush1.msra.mxu0 0.0
        %693 = vmatprep.subr.mxu0 0.0
        %694 = vmatpush1.msra.mxu0 0.0
        %695 = vmatprep.subr.mxu0 0.0
        %696 = vmatpush1.msra.mxu0 0.0
        %697 = vmatprep.subr.mxu0 0.0
        %698 = vmatpush1.msra.mxu0 0.0
        %699 = vmatprep.subr.mxu0 0.0
        %700 = vmatpush1.msra.mxu0 0.0
        %701 = vmatprep.subr.mxu0 0.0
        %702 = vmatpush1.msra.mxu0 0.0
        %703 = vmatprep.subr.mxu0 0.0
        %704 = vmatpush1.msra.mxu0 0.0
        %705 = vmatprep.mubr.f32.mxu0 0.0
        %706 = vmatmul.mubr.f32.gmra.mrb[0].mxu0 %v594
        %v707 = vpop.f32.mrb[0].mxu0
        %v708 = vadd.f32 %v590, %v707
        %v709 = vpop.f32.mrb[0].mxu0
        %710 = vmatprep.mubr.f32.mxu0 0.0
        %711 = vmatmul.mubr.f32.gmra.mrb[0].mxu0 %v597
        %v712 = vpop.f32.mrb[0].mxu0
        %v713 = vadd.f32 %v590, %v712
        %v714 = vpop.f32.mrb[0].mxu0
        %715 = vmatprep.mubr.f32.mxu0 0.0
        %716 = vmatmul.mubr.f32.gmra.mrb[0].mxu0 %v600
        %v717 = vpop.f32.mrb[0].mxu0
        %v718 = vadd.f32 %v590, %v717
        %v719 = vpop.f32.mrb[0].mxu0
        %720 = vmatprep.mubr.f32.mxu0 0.0
        %721 = vmatmul.mubr.f32.gmra.mrb[0].mxu0 %v603
        %v722 = vpop.f32.mrb[0].mxu0
        %v723 = vadd.f32 %v590, %v722
        %v724 = vpop.f32.mrb[0].mxu0
        %725 = vmatprep.mubr.f32.mxu0 0.0
        %726 = vmatmul.mubr.f32.gmra.mrb[0].mxu0 %v606
        %v727 = vpop.f32.mrb[0].mxu0
        %v728 = vadd.f32 %v590, %v727
        %v729 = vpop.f32.mrb[0].mxu0
        %730 = vmatprep.mubr.f32.mxu0 0.0
        %731 = vmatmul.mubr.f32.gmra.mrb[0].mxu0 %v609
        %v732 = vpop.f32.mrb[0].mxu0
        %v733 = vadd.f32 %v590, %v732
        %v734 = vpop.f32.mrb[0].mxu0
        %735 = vmatprep.mubr.f32.mxu0 0.0
        %736 = vmatmul.mubr.f32.gmra.mrb[0].mxu0 %v612
        %v737 = vpop.f32.mrb[0].mxu0
        %v738 = vadd.f32 %v590, %v737
        %v739 = vpop.f32.mrb[0].mxu0
        %740 = vmatprep.mubr.f32.mxu0 0.0
        %741 = vmatmul.mubr.f32.gmra.mrb[0].mxu0 %v615
        %v742 = vpop.f32.mrb[0].mxu0
        %v743 = vadd.f32 %v590, %v742
        %v744 = vpop.f32.mrb[0].mxu0
        %745 = vmatprep.mubr.f32.mxu0 0.0
        %746 = vmatmul.mubr.f32.gmra.mrb[0].mxu0 %v618
        %v747 = vpop.f32.mrb[0].mxu0
        %v748 = vadd.f32 %v590, %v747
        %v749 = vpop.f32.mrb[0].mxu0
        %750 = vmatprep.mubr.f32.mxu0 0.0
        %751 = vmatmul.mubr.f32.gmra.mrb[0].mxu0 %v621
        %v752 = vpop.f32.mrb[0].mxu0
        %v753 = vadd.f32 %v590, %v752
        %v754 = vpop.f32.mrb[0].mxu0
        %755 = vmatprep.mubr.f32.mxu0 0.0
        %756 = vmatmul.mubr.f32.gmra.mrb[0].mxu0 %v624
        %v757 = vpop.f32.mrb[0].mxu0
        %v758 = vadd.f32 %v590, %v757
        %v759 = vpop.f32.mrb[0].mxu0
        %760 = vmatprep.mubr.f32.mxu0 0.0
        %761 = vmatmul.mubr.f32.gmra.mrb[0].mxu0 %v627
        %v762 = vpop.f32.mrb[0].mxu0
        %v763 = vadd.f32 %v590, %v762
        %v764 = vpop.f32.mrb[0].mxu0
        %765 = vmatprep.mubr.f32.mxu0 0.0
        %766 = vmatmul.mubr.f32.gmra.mrb[0].mxu0 %v630
        %v767 = vpop.f32.mrb[0].mxu0
        %v768 = vadd.f32 %v590, %v767
        %v769 = vpop.f32.mrb[0].mxu0
        %770 = vmatprep.mubr.f32.mxu0 0.0
        %771 = vmatmul.mubr.f32.gmra.mrb[0].mxu0 %v633
        %v772 = vpop.f32.mrb[0].mxu0
        %v773 = vadd.f32 %v590, %v772
        %v774 = vpop.f32.mrb[0].mxu0
        %775 = vmatprep.mubr.f32.mxu0 0.0
        %776 = vmatmul.mubr.f32.gmra.mrb[0].mxu0 %v636
        %v777 = vpop.f32.mrb[0].mxu0
        %v778 = vadd.f32 %v590, %v777
        %v779 = vpop.f32.mrb[0].mxu0
        %780 = vmatprep.mubr.f32.mxu0 0.0
        %781 = vmatmul.mubr.f32.gmra.mrb[0].mxu0 %v639
        %v782 = vpop.f32.mrb[0].mxu0
        %v783 = vadd.f32 %v590, %v782
        %v784 = vpop.f32.mrb[0].mxu0
        %785 = vdwg.mxu0
        %v786 = vld [vmem:[#allocation2] sm:$0xff]
        %v787 = vld [vmem:[#allocation2 + $0x8] sm:$0xff]
        %v788 = vld [vmem:[#allocation2 + $0x10] sm:$0xff]
        %v789 = vld [vmem:[#allocation2 + $0x18] sm:$0xff]
        %v790 = vld [vmem:[#allocation2 + $0x20] sm:$0xff]
        %v791 = vld [vmem:[#allocation2 + $0x28] sm:$0xff]
        %v792 = vld [vmem:[#allocation2 + $0x30] sm:$0xff]
        %v793 = vld [vmem:[#allocation2 + $0x38] sm:$0xff]
        %v794 = vld [vmem:[#allocation2 + $0x40] sm:$0xff]
        %v795 = vld [vmem:[#allocation2 + $0x48] sm:$0xff]
        %v796 = vld [vmem:[#allocation2 + $0x50] sm:$0xff]
        %v797 = vld [vmem:[#allocation2 + $0x58] sm:$0xff]
        %v798 = vld [vmem:[#allocation2 + $0x60] sm:$0xff]
        %v799 = vld [vmem:[#allocation2 + $0x68] sm:$0xff]
        %v800 = vld [vmem:[#allocation2 + $0x70] sm:$0xff]
        %v801 = vld [vmem:[#allocation2 + $0x78] sm:$0xff]
        %v802 = vld [vmem:[%s464] sm:$0xff]
        %v803 = vld [vmem:[%s464 + $0x8] sm:$0xff]
        %v804 = vld [vmem:[%s464 + $0x10] sm:$0xff]
        %v805 = vld [vmem:[%s464 + $0x18] sm:$0xff]
        %v806 = vld [vmem:[%s464 + $0x20] sm:$0xff]
        %v807 = vld [vmem:[%s464 + $0x28] sm:$0xff]
        %v808 = vld [vmem:[%s464 + $0x30] sm:$0xff]
        %v809 = vld [vmem:[%s464 + $0x38] sm:$0xff]
        %v810 = vld [vmem:[%s464 + $0x40] sm:$0xff]
        %v811 = vld [vmem:[%s464 + $0x48] sm:$0xff]
        %v812 = vld [vmem:[%s464 + $0x50] sm:$0xff]
        %v813 = vld [vmem:[%s464 + $0x58] sm:$0xff]
        %v814 = vld [vmem:[%s464 + $0x60] sm:$0xff]
        %v815 = vld [vmem:[%s464 + $0x68] sm:$0xff]
        %v816 = vld [vmem:[%s464 + $0x70] sm:$0xff]
        %v817 = vld [vmem:[%s464 + $0x78] sm:$0xff]
        %818 = vmatprep.subr.mxu0 0.0
        %819 = vmatpush1.msra.mxu0 %v708
        %820 = vmatprep.subr.mxu0 0.0
        %821 = vmatpush1.msra.mxu0 %v713
        %822 = vmatprep.subr.mxu0 0.0
        %823 = vmatpush1.msra.mxu0 %v718
        %824 = vmatprep.subr.mxu0 0.0
        %825 = vmatpush1.msra.mxu0 %v723
        %826 = vmatprep.subr.mxu0 0.0
        %827 = vmatpush1.msra.mxu0 %v728
        %828 = vmatprep.subr.mxu0 0.0
        %829 = vmatpush1.msra.mxu0 %v733
        %830 = vmatprep.subr.mxu0 0.0
        %831 = vmatpush1.msra.mxu0 %v738
        %832 = vmatprep.subr.mxu0 0.0
        %833 = vmatpush1.msra.mxu0 %v743
        %834 = vmatprep.subr.mxu0 0.0
        %835 = vmatpush1.msra.mxu0 %v748
        %836 = vmatprep.subr.mxu0 0.0
        %837 = vmatpush1.msra.mxu0 %v753
        %838 = vmatprep.subr.mxu0 0.0
        %839 = vmatpush1.msra.mxu0 %v758
        %840 = vmatprep.subr.mxu0 0.0
        %841 = vmatpush1.msra.mxu0 %v763
        %842 = vmatprep.subr.mxu0 0.0
        %843 = vmatpush1.msra.mxu0 %v768
        %844 = vmatprep.subr.mxu0 0.0
        %845 = vmatpush1.msra.mxu0 %v773
        %846 = vmatprep.subr.mxu0 0.0
        %847 = vmatpush1.msra.mxu0 %v778
        %848 = vmatprep.subr.mxu0 0.0
        %849 = vmatpush1.msra.mxu0 %v783
        %850 = vmatprep.subr.mxu0 0.0
        %851 = vmatpush1.msra.mxu0 0.0
        %852 = vmatprep.subr.mxu0 0.0
        %853 = vmatpush1.msra.mxu0 0.0
        %854 = vmatprep.subr.mxu0 0.0
        %855 = vmatpush1.msra.mxu0 0.0
        %856 = vmatprep.subr.mxu0 0.0
        %857 = vmatpush1.msra.mxu0 0.0
        %858 = vmatprep.subr.mxu0 0.0
        %859 = vmatpush1.msra.mxu0 0.0
        %860 = vmatprep.subr.mxu0 0.0
        %861 = vmatpush1.msra.mxu0 0.0
        %862 = vmatprep.subr.mxu0 0.0
        %863 = vmatpush1.msra.mxu0 0.0
        %864 = vmatprep.subr.mxu0 0.0
        %865 = vmatpush1.msra.mxu0 0.0
        %866 = vmatprep.subr.mxu0 0.0
        %867 = vmatpush1.msra.mxu0 0.0
        %868 = vmatprep.subr.mxu0 0.0
        %869 = vmatpush1.msra.mxu0 0.0
        %870 = vmatprep.subr.mxu0 0.0
        %871 = vmatpush1.msra.mxu0 0.0
        %872 = vmatprep.subr.mxu0 0.0
        %873 = vmatpush1.msra.mxu0 0.0
        %874 = vmatprep.subr.mxu0 0.0
        %875 = vmatpush1.msra.mxu0 0.0
        %876 = vmatprep.subr.mxu0 0.0
        %877 = vmatpush1.msra.mxu0 0.0
        %878 = vmatprep.subr.mxu0 0.0
        %879 = vmatpush1.msra.mxu0 0.0
        %880 = vmatprep.subr.mxu0 0.0
        %881 = vmatpush1.msra.mxu0 0.0
        %882 = vmatprep.mubr.f32.mxu0 0.0
        %883 = vmatmul.mubr.f32.gmra.mrb[0].mxu0 %v802
        %v884 = vpop.f32.mrb[0].mxu0
        %v885 = vadd.f32 0.0, %v884
        %v886 = vpop.f32.mrb[0].mxu0
        %887 = vmatprep.mubr.f32.mxu0 0.0
        %888 = vmatmul.mubr.f32.gmra.mrb[0].mxu0 %v803
        %v889 = vpop.f32.mrb[0].mxu0
        %v890 = vadd.f32 0.0, %v889
        %v891 = vpop.f32.mrb[0].mxu0
        %892 = vmatprep.mubr.f32.mxu0 0.0
        %893 = vmatmul.mubr.f32.gmra.mrb[0].mxu0 %v804
        %v894 = vpop.f32.mrb[0].mxu0
        %v895 = vadd.f32 0.0, %v894
        %v896 = vpop.f32.mrb[0].mxu0
        %897 = vmatprep.mubr.f32.mxu0 0.0
        %898 = vmatmul.mubr.f32.gmra.mrb[0].mxu0 %v805
        %v899 = vpop.f32.mrb[0].mxu0
        %v900 = vadd.f32 0.0, %v899
        %v901 = vpop.f32.mrb[0].mxu0
        %902 = vmatprep.mubr.f32.mxu0 0.0
        %903 = vmatmul.mubr.f32.gmra.mrb[0].mxu0 %v806
        %v904 = vpop.f32.mrb[0].mxu0
        %v905 = vadd.f32 0.0, %v904
        %v906 = vpop.f32.mrb[0].mxu0
        %907 = vmatprep.mubr.f32.mxu0 0.0
        %908 = vmatmul.mubr.f32.gmra.mrb[0].mxu0 %v807
        %v909 = vpop.f32.mrb[0].mxu0
        %v910 = vadd.f32 0.0, %v909
        %v911 = vpop.f32.mrb[0].mxu0
        %912 = vmatprep.mubr.f32.mxu0 0.0
        %913 = vmatmul.mubr.f32.gmra.mrb[0].mxu0 %v808
        %v914 = vpop.f32.mrb[0].mxu0
        %v915 = vadd.f32 0.0, %v914
        %v916 = vpop.f32.mrb[0].mxu0
        %917 = vmatprep.mubr.f32.mxu0 0.0
        %918 = vmatmul.mubr.f32.gmra.mrb[0].mxu0 %v809
        %v919 = vpop.f32.mrb[0].mxu0
        %v920 = vadd.f32 0.0, %v919
        %v921 = vpop.f32.mrb[0].mxu0
        %922 = vmatprep.mubr.f32.mxu0 0.0
        %923 = vmatmul.mubr.f32.gmra.mrb[0].mxu0 %v810
        %v924 = vpop.f32.mrb[0].mxu0
        %v925 = vadd.f32 0.0, %v924
        %v926 = vpop.f32.mrb[0].mxu0
        %927 = vmatprep.mubr.f32.mxu0 0.0
        %928 = vmatmul.mubr.f32.gmra.mrb[0].mxu0 %v811
        %v929 = vpop.f32.mrb[0].mxu0
        %v930 = vadd.f32 0.0, %v929
        %v931 = vpop.f32.mrb[0].mxu0
        %932 = vmatprep.mubr.f32.mxu0 0.0
        %933 = vmatmul.mubr.f32.gmra.mrb[0].mxu0 %v812
        %v934 = vpop.f32.mrb[0].mxu0
        %v935 = vadd.f32 0.0, %v934
        %v936 = vpop.f32.mrb[0].mxu0
        %937 = vmatprep.mubr.f32.mxu0 0.0
        %938 = vmatmul.mubr.f32.gmra.mrb[0].mxu0 %v813
        %v939 = vpop.f32.mrb[0].mxu0
        %v940 = vadd.f32 0.0, %v939
        %v941 = vpop.f32.mrb[0].mxu0
        %942 = vmatprep.mubr.f32.mxu0 0.0
        %943 = vmatmul.mubr.f32.gmra.mrb[0].mxu0 %v814
        %v944 = vpop.f32.mrb[0].mxu0
        %v945 = vadd.f32 0.0, %v944
        %v946 = vpop.f32.mrb[0].mxu0
        %947 = vmatprep.mubr.f32.mxu0 0.0
        %948 = vmatmul.mubr.f32.gmra.mrb[0].mxu0 %v815
        %v949 = vpop.f32.mrb[0].mxu0
        %v950 = vadd.f32 0.0, %v949
        %v951 = vpop.f32.mrb[0].mxu0
        %952 = vmatprep.mubr.f32.mxu0 0.0
        %953 = vmatmul.mubr.f32.gmra.mrb[0].mxu0 %v816
        %v954 = vpop.f32.mrb[0].mxu0
        %v955 = vadd.f32 0.0, %v954
        %v956 = vpop.f32.mrb[0].mxu0
        %957 = vmatprep.mubr.f32.mxu0 0.0
        %958 = vmatmul.mubr.f32.gmra.mrb[0].mxu0 %v817
        %v959 = vpop.f32.mrb[0].mxu0
        %v960 = vadd.f32 0.0, %v959
        %v961 = vpop.f32.mrb[0].mxu0
        %962 = vdwg.mxu0
        %v963 = vadd.f32 %v786, %v885
        %v964 = vadd.f32 %v787, %v890
        %v965 = vadd.f32 %v788, %v895
        %v966 = vadd.f32 %v789, %v900
        %v967 = vadd.f32 %v790, %v905
        %v968 = vadd.f32 %v791, %v910
        %v969 = vadd.f32 %v792, %v915
        %v970 = vadd.f32 %v793, %v920
        %v971 = vadd.f32 %v794, %v925
        %v972 = vadd.f32 %v795, %v930
        %v973 = vadd.f32 %v796, %v935
        %v974 = vadd.f32 %v797, %v940
        %v975 = vadd.f32 %v798, %v945
        %v976 = vadd.f32 %v799, %v950
        %v977 = vadd.f32 %v800, %v955
        %v978 = vadd.f32 %v801, %v960
        %979 = vst.msk [vmem:[#allocation2] sm:$0xff] %vm592, %v963
        %980 = vst.msk [vmem:[#allocation2 + $0x8] sm:$0xff] %vm592, %v964
        %981 = vst.msk [vmem:[#allocation2 + $0x10] sm:$0xff] %vm592, %v965
        %982 = vst.msk [vmem:[#allocation2 + $0x18] sm:$0xff] %vm592, %v966
        %983 = vst.msk [vmem:[#allocation2 + $0x20] sm:$0xff] %vm592, %v967
        %984 = vst.msk [vmem:[#allocation2 + $0x28] sm:$0xff] %vm592, %v968
        %985 = vst.msk [vmem:[#allocation2 + $0x30] sm:$0xff] %vm592, %v969
        %986 = vst.msk [vmem:[#allocation2 + $0x38] sm:$0xff] %vm592, %v970
        %987 = vst.msk [vmem:[#allocation2 + $0x40] sm:$0xff] %vm592, %v971
        %988 = vst.msk [vmem:[#allocation2 + $0x48] sm:$0xff] %vm592, %v972
        %989 = vst.msk [vmem:[#allocation2 + $0x50] sm:$0xff] %vm592, %v973
        %990 = vst.msk [vmem:[#allocation2 + $0x58] sm:$0xff] %vm592, %v974
        %991 = vst.msk [vmem:[#allocation2 + $0x60] sm:$0xff] %vm592, %v975
        %992 = vst.msk [vmem:[#allocation2 + $0x68] sm:$0xff] %vm592, %v976
        %993 = vst.msk [vmem:[#allocation2 + $0x70] sm:$0xff] %vm592, %v977
        %994 = vst.msk [vmem:[#allocation2 + $0x78] sm:$0xff] %vm592, %v978
        %p995 = scmp.eq.s32.totalorder %s40, 1
        // Predicated region
        $region93: #{tpu_custom_call.1} parent=55 // pred_check
          %p996 = pneg %p995
        $region94: #{tpu_custom_call.1} parent=55 // pred_check_branch
          %998 = sbr.rel (%p996) target = $region96
        $region95: #{tpu_custom_call.1} parent=55 // pred_region
          %v999 = vld [vmem:[%s455] sm:$0xff]
          %v1000 = vld [vmem:[%s455 + $0x8] sm:$0xff]
          %v1001 = vld [vmem:[%s455 + $0x10] sm:$0xff]
          %v1002 = vld [vmem:[%s455 + $0x18] sm:$0xff]
          %v1003 = vld [vmem:[%s455 + $0x20] sm:$0xff]
          %v1004 = vld [vmem:[%s455 + $0x28] sm:$0xff]
          %v1005 = vld [vmem:[%s455 + $0x30] sm:$0xff]
          %v1006 = vld [vmem:[%s455 + $0x38] sm:$0xff]
          %v1007 = vld [vmem:[%s455 + $0x40] sm:$0xff]
          %v1008 = vld [vmem:[%s455 + $0x48] sm:$0xff]
          %v1009 = vld [vmem:[%s455 + $0x50] sm:$0xff]
          %v1010 = vld [vmem:[%s455 + $0x58] sm:$0xff]
          %v1011 = vld [vmem:[%s455 + $0x60] sm:$0xff]
          %v1012 = vld [vmem:[%s455 + $0x68] sm:$0xff]
          %v1013 = vld [vmem:[%s455 + $0x70] sm:$0xff]
          %v1014 = vld [vmem:[%s455 + $0x78] sm:$0xff]
          %v1015 = vld [vmem:[#allocation12] sm:$0xff]
          %v1016 = vld [vmem:[#allocation12 + $0x8] sm:$0xff]
          %v1017 = vld [vmem:[#allocation12 + $0x10] sm:$0xff]
          %v1018 = vld [vmem:[#allocation12 + $0x18] sm:$0xff]
          %v1019 = vld [vmem:[#allocation13] sm:$0x1]
          %v1021 = vlaneseq
          %v1022 = vshrl.u32 %v1021, 7
          %v1023 = vsub.s32 0, %v1022
          %v1024 = vrot.slane %v1019, %v1023
          %v1027 = vsel %vm592, %v999, 0
          %v1030 = vsel %vm592, %v1000, 0
          %v1033 = vsel %vm592, %v1001, 0
          %v1036 = vsel %vm592, %v1002, 0
          %v1039 = vsel %vm592, %v1003, 0
          %v1042 = vsel %vm592, %v1004, 0
          %v1045 = vsel %vm592, %v1005, 0
          %v1048 = vsel %vm592, %v1006, 0
          %v1051 = vsel %vm592, %v1007, 0
          %v1054 = vsel %vm592, %v1008, 0
          %v1057 = vsel %vm592, %v1009, 0
          %v1060 = vsel %vm592, %v1010, 0
          %v1063 = vsel %vm592, %v1011, 0
          %v1066 = vsel %vm592, %v1012, 0
          %v1069 = vsel %vm592, %v1013, 0
          %v1072 = vsel %vm592, %v1014, 0
          %1074 = vmatprep.subr.mxu0 0.0
          %1075 = vmatpush1.msra.mxu0 %v1015
          %1076 = vmatprep.subr.mxu0 0.0
          %1077 = vmatpush1.msra.mxu0 %v1016
          %1078 = vmatprep.subr.mxu0 0.0
          %1079 = vmatpush1.msra.mxu0 %v1017
          %1080 = vmatprep.subr.mxu0 0.0
          %1081 = vmatpush1.msra.mxu0 %v1018
          %1082 = vmatprep.subr.mxu0 0.0
          %1083 = vmatpush1.msra.mxu0 0.0
          %1084 = vmatprep.subr.mxu0 0.0
          %1085 = vmatpush1.msra.mxu0 0.0
          %1086 = vmatprep.subr.mxu0 0.0
          %1087 = vmatpush1.msra.mxu0 0.0
          %1088 = vmatprep.subr.mxu0 0.0
          %1089 = vmatpush1.msra.mxu0 0.0
          %1090 = vmatprep.subr.mxu0 0.0
          %1091 = vmatpush1.msra.mxu0 0.0
          %1092 = vmatprep.subr.mxu0 0.0
          %1093 = vmatpush1.msra.mxu0 0.0
          %1094 = vmatprep.subr.mxu0 0.0
          %1095 = vmatpush1.msra.mxu0 0.0
          %1096 = vmatprep.subr.mxu0 0.0
          %1097 = vmatpush1.msra.mxu0 0.0
          %1098 = vmatprep.subr.mxu0 0.0
          %1099 = vmatpush1.msra.mxu0 0.0
          %1100 = vmatprep.subr.mxu0 0.0
          %1101 = vmatpush1.msra.mxu0 0.0
          %1102 = vmatprep.subr.mxu0 0.0
          %1103 = vmatpush1.msra.mxu0 0.0
          %1104 = vmatprep.subr.mxu0 0.0
          %1105 = vmatpush1.msra.mxu0 0.0
          %1106 = vmatprep.subr.mxu0 0.0
          %1107 = vmatpush1.msra.mxu0 0.0
          %1108 = vmatprep.subr.mxu0 0.0
          %1109 = vmatpush1.msra.mxu0 0.0
          %1110 = vmatprep.subr.mxu0 0.0
          %1111 = vmatpush1.msra.mxu0 0.0
          %1112 = vmatprep.subr.mxu0 0.0
          %1113 = vmatpush1.msra.mxu0 0.0
          %1114 = vmatprep.subr.mxu0 0.0
          %1115 = vmatpush1.msra.mxu0 0.0
          %1116 = vmatprep.subr.mxu0 0.0
          %1117 = vmatpush1.msra.mxu0 0.0
          %1118 = vmatprep.subr.mxu0 0.0
          %1119 = vmatpush1.msra.mxu0 0.0
          %1120 = vmatprep.subr.mxu0 0.0
          %1121 = vmatpush1.msra.mxu0 0.0
          %1122 = vmatprep.subr.mxu0 0.0
          %1123 = vmatpush1.msra.mxu0 0.0
          %1124 = vmatprep.subr.mxu0 0.0
          %1125 = vmatpush1.msra.mxu0 0.0
          %1126 = vmatprep.subr.mxu0 0.0
          %1127 = vmatpush1.msra.mxu0 0.0
          %1128 = vmatprep.subr.mxu0 0.0
          %1129 = vmatpush1.msra.mxu0 0.0
          %1130 = vmatprep.subr.mxu0 0.0
          %1131 = vmatpush1.msra.mxu0 0.0
          %1132 = vmatprep.subr.mxu0 0.0
          %1133 = vmatpush1.msra.mxu0 0.0
          %1134 = vmatprep.subr.mxu0 0.0
          %1135 = vmatpush1.msra.mxu0 0.0
          %1136 = vmatprep.subr.mxu0 0.0
          %1137 = vmatpush1.msra.mxu0 0.0
          %1138 = vmatprep.mubr.f32.mxu0 0.0
          %1139 = vmatmul.mubr.f32.gmra.mrb[0].mxu0 %v1027
          %v1140 = vpop.f32.mrb[0].mxu0
          %v1141 = vadd.f32 %v1024, %v1140
          %v1142 = vpop.f32.mrb[0].mxu0
          %1143 = vmatprep.mubr.f32.mxu0 0.0
          %1144 = vmatmul.mubr.f32.gmra.mrb[0].mxu0 %v1030
          %v1145 = vpop.f32.mrb[0].mxu0
          %v1146 = vadd.f32 %v1024, %v1145
          %v1147 = vpop.f32.mrb[0].mxu0
          %1148 = vmatprep.mubr.f32.mxu0 0.0
          %1149 = vmatmul.mubr.f32.gmra.mrb[0].mxu0 %v1033
          %v1150 = vpop.f32.mrb[0].mxu0
          %v1151 = vadd.f32 %v1024, %v1150
          %v1152 = vpop.f32.mrb[0].mxu0
          %1153 = vmatprep.mubr.f32.mxu0 0.0
          %1154 = vmatmul.mubr.f32.gmra.mrb[0].mxu0 %v1036
          %v1155 = vpop.f32.mrb[0].mxu0
          %v1156 = vadd.f32 %v1024, %v1155
          %v1157 = vpop.f32.mrb[0].mxu0
          %1158 = vmatprep.mubr.f32.mxu0 0.0
          %1159 = vmatmul.mubr.f32.gmra.mrb[0].mxu0 %v1039
          %v1160 = vpop.f32.mrb[0].mxu0
          %v1161 = vadd.f32 %v1024, %v1160
          %v1162 = vpop.f32.mrb[0].mxu0
          %1163 = vmatprep.mubr.f32.mxu0 0.0
          %1164 = vmatmul.mubr.f32.gmra.mrb[0].mxu0 %v1042
          %v1165 = vpop.f32.mrb[0].mxu0
          %v1166 = vadd.f32 %v1024, %v1165
          %v1167 = vpop.f32.mrb[0].mxu0
          %1168 = vmatprep.mubr.f32.mxu0 0.0
          %1169 = vmatmul.mubr.f32.gmra.mrb[0].mxu0 %v1045
          %v1170 = vpop.f32.mrb[0].mxu0
          %v1171 = vadd.f32 %v1024, %v1170
          %v1172 = vpop.f32.mrb[0].mxu0
          %1173 = vmatprep.mubr.f32.mxu0 0.0
          %1174 = vmatmul.mubr.f32.gmra.mrb[0].mxu0 %v1048
          %v1175 = vpop.f32.mrb[0].mxu0
          %v1176 = vadd.f32 %v1024, %v1175
          %v1177 = vpop.f32.mrb[0].mxu0
          %1178 = vmatprep.mubr.f32.mxu0 0.0
          %1179 = vmatmul.mubr.f32.gmra.mrb[0].mxu0 %v1051
          %v1180 = vpop.f32.mrb[0].mxu0
          %v1181 = vadd.f32 %v1024, %v1180
          %v1182 = vpop.f32.mrb[0].mxu0
          %1183 = vmatprep.mubr.f32.mxu0 0.0
          %1184 = vmatmul.mubr.f32.gmra.mrb[0].mxu0 %v1054
          %v1185 = vpop.f32.mrb[0].mxu0
          %v1186 = vadd.f32 %v1024, %v1185
          %v1187 = vpop.f32.mrb[0].mxu0
          %1188 = vmatprep.mubr.f32.mxu0 0.0
          %1189 = vmatmul.mubr.f32.gmra.mrb[0].mxu0 %v1057
          %v1190 = vpop.f32.mrb[0].mxu0
          %v1191 = vadd.f32 %v1024, %v1190
          %v1192 = vpop.f32.mrb[0].mxu0
          %1193 = vmatprep.mubr.f32.mxu0 0.0
          %1194 = vmatmul.mubr.f32.gmra.mrb[0].mxu0 %v1060
          %v1195 = vpop.f32.mrb[0].mxu0
          %v1196 = vadd.f32 %v1024, %v1195
          %v1197 = vpop.f32.mrb[0].mxu0
          %1198 = vmatprep.mubr.f32.mxu0 0.0
          %1199 = vmatmul.mubr.f32.gmra.mrb[0].mxu0 %v1063
          %v1200 = vpop.f32.mrb[0].mxu0
          %v1201 = vadd.f32 %v1024, %v1200
          %v1202 = vpop.f32.mrb[0].mxu0
          %1203 = vmatprep.mubr.f32.mxu0 0.0
          %1204 = vmatmul.mubr.f32.gmra.mrb[0].mxu0 %v1066
          %v1205 = vpop.f32.mrb[0].mxu0
          %v1206 = vadd.f32 %v1024, %v1205
          %v1207 = vpop.f32.mrb[0].mxu0
          %1208 = vmatprep.mubr.f32.mxu0 0.0
          %1209 = vmatmul.mubr.f32.gmra.mrb[0].mxu0 %v1069
          %v1210 = vpop.f32.mrb[0].mxu0
          %v1211 = vadd.f32 %v1024, %v1210
          %v1212 = vpop.f32.mrb[0].mxu0
          %1213 = vmatprep.mubr.f32.mxu0 0.0
          %1214 = vmatmul.mubr.f32.gmra.mrb[0].mxu0 %v1072
          %v1215 = vpop.f32.mrb[0].mxu0
          %v1216 = vadd.f32 %v1024, %v1215
          %v1217 = vpop.f32.mrb[0].mxu0
          %1218 = vdwg.mxu0
          %s1219 = sld [smem:[#allocation3]]
          %v1220 = vld [vmem:[%s473] sm:$0xff]
          %v1221 = vld [vmem:[%s473 + $0x8] sm:$0xff]
          %v1222 = vld [vmem:[%s473 + $0x10] sm:$0xff]
          %v1223 = vld [vmem:[%s473 + $0x18] sm:$0xff]
          %v1224 = vld [vmem:[%s473 + $0x20] sm:$0xff]
          %v1225 = vld [vmem:[%s473 + $0x28] sm:$0xff]
          %v1226 = vld [vmem:[%s473 + $0x30] sm:$0xff]
          %v1227 = vld [vmem:[%s473 + $0x38] sm:$0xff]
          %v1228 = vld [vmem:[%s473 + $0x40] sm:$0xff]
          %v1229 = vld [vmem:[%s473 + $0x48] sm:$0xff]
          %v1230 = vld [vmem:[%s473 + $0x50] sm:$0xff]
          %v1231 = vld [vmem:[%s473 + $0x58] sm:$0xff]
          %v1232 = vld [vmem:[%s473 + $0x60] sm:$0xff]
          %v1233 = vld [vmem:[%s473 + $0x68] sm:$0xff]
          %v1234 = vld [vmem:[%s473 + $0x70] sm:$0xff]
          %v1235 = vld [vmem:[%s473 + $0x78] sm:$0xff]
          %v1236 = vld [vmem:[#allocation2] sm:$0xff]
          %v1237 = vld [vmem:[#allocation2 + $0x8] sm:$0xff]
          %v1238 = vld [vmem:[#allocation2 + $0x10] sm:$0xff]
          %v1239 = vld [vmem:[#allocation2 + $0x18] sm:$0xff]
          %v1240 = vld [vmem:[#allocation2 + $0x20] sm:$0xff]
          %v1241 = vld [vmem:[#allocation2 + $0x28] sm:$0xff]
          %v1242 = vld [vmem:[#allocation2 + $0x30] sm:$0xff]
          %v1243 = vld [vmem:[#allocation2 + $0x38] sm:$0xff]
          %v1244 = vld [vmem:[#allocation2 + $0x40] sm:$0xff]
          %v1245 = vld [vmem:[#allocation2 + $0x48] sm:$0xff]
          %v1246 = vld [vmem:[#allocation2 + $0x50] sm:$0xff]
          %v1247 = vld [vmem:[#allocation2 + $0x58] sm:$0xff]
          %v1248 = vld [vmem:[#allocation2 + $0x60] sm:$0xff]
          %v1249 = vld [vmem:[#allocation2 + $0x68] sm:$0xff]
          %v1250 = vld [vmem:[#allocation2 + $0x70] sm:$0xff]
          %v1251 = vld [vmem:[#allocation2 + $0x78] sm:$0xff]
          %1253 = vset.pattern.permute.xlu0 0
          %1254 = vperm.xlu0 %1253, %v1220
          %v1255 = vpop.permute.xlu0 %1254
          %1258 = vset.pattern.permute.xlu0 0
          %1259 = vperm.xlu0 %1258, %v1221
          %v1260 = vpop.permute.xlu0 %1259
          %1263 = vset.pattern.permute.xlu0 0
          %1264 = vperm.xlu0 %1263, %v1222
          %v1265 = vpop.permute.xlu0 %1264
          %1268 = vset.pattern.permute.xlu0 0
          %1269 = vperm.xlu0 %1268, %v1223
          %v1270 = vpop.permute.xlu0 %1269
          %1273 = vset.pattern.permute.xlu0 0
          %1274 = vperm.xlu0 %1273, %v1224
          %v1275 = vpop.permute.xlu0 %1274
          %1278 = vset.pattern.permute.xlu0 0
          %1279 = vperm.xlu0 %1278, %v1225
          %v1280 = vpop.permute.xlu0 %1279
          %1283 = vset.pattern.permute.xlu0 0
          %1284 = vperm.xlu0 %1283, %v1226
          %v1285 = vpop.permute.xlu0 %1284
          %1288 = vset.pattern.permute.xlu0 0
          %1289 = vperm.xlu0 %1288, %v1227
          %v1290 = vpop.permute.xlu0 %1289
          %1293 = vset.pattern.permute.xlu0 0
          %1294 = vperm.xlu0 %1293, %v1228
          %v1295 = vpop.permute.xlu0 %1294
          %1298 = vset.pattern.permute.xlu0 0
          %1299 = vperm.xlu0 %1298, %v1229
          %v1300 = vpop.permute.xlu0 %1299
          %1303 = vset.pattern.permute.xlu0 0
          %1304 = vperm.xlu0 %1303, %v1230
          %v1305 = vpop.permute.xlu0 %1304
          %1308 = vset.pattern.permute.xlu0 0
          %1309 = vperm.xlu0 %1308, %v1231
          %v1310 = vpop.permute.xlu0 %1309
          %1313 = vset.pattern.permute.xlu0 0
          %1314 = vperm.xlu0 %1313, %v1232
          %v1315 = vpop.permute.xlu0 %1314
          %1318 = vset.pattern.permute.xlu0 0
          %1319 = vperm.xlu0 %1318, %v1233
          %v1320 = vpop.permute.xlu0 %1319
          %1323 = vset.pattern.permute.xlu0 0
          %1324 = vperm.xlu0 %1323, %v1234
          %v1325 = vpop.permute.xlu0 %1324
          %1328 = vset.pattern.permute.xlu0 0
          %1329 = vperm.xlu0 %1328, %v1235
          %v1330 = vpop.permute.xlu0 %1329
          %v1332 = vadd.f32 %v1255, %v1236
          %v1333 = vadd.f32 %v1260, %v1237
          %v1334 = vadd.f32 %v1265, %v1238
          %v1335 = vadd.f32 %v1270, %v1239
          %v1336 = vadd.f32 %v1275, %v1240
          %v1337 = vadd.f32 %v1280, %v1241
          %v1338 = vadd.f32 %v1285, %v1242
          %v1339 = vadd.f32 %v1290, %v1243
          %v1340 = vadd.f32 %v1295, %v1244
          %v1341 = vadd.f32 %v1300, %v1245
          %v1342 = vadd.f32 %v1305, %v1246
          %v1343 = vadd.f32 %v1310, %v1247
          %v1344 = vadd.f32 %v1315, %v1248
          %v1345 = vadd.f32 %v1320, %v1249
          %v1346 = vadd.f32 %v1325, %v1250
          %v1347 = vadd.f32 %v1330, %v1251
          %v1348 = vstv %s1219
          %v1349 = vmul.f32 %v1348, %v1332
          %v1350 = vmul.f32 %v1348, %v1333
          %v1351 = vmul.f32 %v1348, %v1334
          %v1352 = vmul.f32 %v1348, %v1335
          %v1353 = vmul.f32 %v1348, %v1336
          %v1354 = vmul.f32 %v1348, %v1337
          %v1355 = vmul.f32 %v1348, %v1338
          %v1356 = vmul.f32 %v1348, %v1339
          %v1357 = vmul.f32 %v1348, %v1340
          %v1358 = vmul.f32 %v1348, %v1341
          %v1359 = vmul.f32 %v1348, %v1342
          %v1360 = vmul.f32 %v1348, %v1343
          %v1361 = vmul.f32 %v1348, %v1344
          %v1362 = vmul.f32 %v1348, %v1345
          %v1363 = vmul.f32 %v1348, %v1346
          %v1364 = vmul.f32 %v1348, %v1347
          %v1365 = vsub.f32 %v1141, %v1349
          %v1366 = vsub.f32 %v1146, %v1350
          %v1367 = vsub.f32 %v1151, %v1351
          %v1368 = vsub.f32 %v1156, %v1352
          %v1369 = vsub.f32 %v1161, %v1353
          %v1370 = vsub.f32 %v1166, %v1354
          %v1371 = vsub.f32 %v1171, %v1355
          %v1372 = vsub.f32 %v1176, %v1356
          %v1373 = vsub.f32 %v1181, %v1357
          %v1374 = vsub.f32 %v1186, %v1358
          %v1375 = vsub.f32 %v1191, %v1359
          %v1376 = vsub.f32 %v1196, %v1360
          %v1377 = vsub.f32 %v1201, %v1361
          %v1378 = vsub.f32 %v1206, %v1362
          %v1379 = vsub.f32 %v1211, %v1363
          %v1380 = vsub.f32 %v1216, %v1364
          %v1381 = vmax.f32 %v1365, 0.0
          %v1382 = vmax.f32 %v1366, 0.0
          %v1383 = vmax.f32 %v1367, 0.0
          %v1384 = vmax.f32 %v1368, 0.0
          %v1385 = vmax.f32 %v1369, 0.0
          %v1386 = vmax.f32 %v1370, 0.0
          %v1387 = vmax.f32 %v1371, 0.0
          %v1388 = vmax.f32 %v1372, 0.0
          %v1389 = vmax.f32 %v1373, 0.0
          %v1390 = vmax.f32 %v1374, 0.0
          %v1391 = vmax.f32 %v1375, 0.0
          %v1392 = vmax.f32 %v1376, 0.0
          %v1393 = vmax.f32 %v1377, 0.0
          %v1394 = vmax.f32 %v1378, 0.0
          %v1395 = vmax.f32 %v1379, 0.0
          %v1396 = vmax.f32 %v1380, 0.0
          %1397 = vst.msk [vmem:[%s538] sm:$0xff] %vm592, %v1381
          %1398 = vst.msk [vmem:[%s538 + $0x8] sm:$0xff] %vm592, %v1382
          %1399 = vst.msk [vmem:[%s538 + $0x10] sm:$0xff] %vm592, %v1383
          %1400 = vst.msk [vmem:[%s538 + $0x18] sm:$0xff] %vm592, %v1384
          %1401 = vst.msk [vmem:[%s538 + $0x20] sm:$0xff] %vm592, %v1385
          %1402 = vst.msk [vmem:[%s538 + $0x28] sm:$0xff] %vm592, %v1386
          %1403 = vst.msk [vmem:[%s538 + $0x30] sm:$0xff] %vm592, %v1387
          %1404 = vst.msk [vmem:[%s538 + $0x38] sm:$0xff] %vm592, %v1388
          %1405 = vst.msk [vmem:[%s538 + $0x40] sm:$0xff] %vm592, %v1389
          %1406 = vst.msk [vmem:[%s538 + $0x48] sm:$0xff] %vm592, %v1390
          %1407 = vst.msk [vmem:[%s538 + $0x50] sm:$0xff] %vm592, %v1391
          %1408 = vst.msk [vmem:[%s538 + $0x58] sm:$0xff] %vm592, %v1392
          %1409 = vst.msk [vmem:[%s538 + $0x60] sm:$0xff] %vm592, %v1393
          %1410 = vst.msk [vmem:[%s538 + $0x68] sm:$0xff] %vm592, %v1394
          %1411 = vst.msk [vmem:[%s538 + $0x70] sm:$0xff] %vm592, %v1395
          %1412 = vst.msk [vmem:[%s538 + $0x78] sm:$0xff] %vm592, %v1396
        $region96: #{tpu_custom_call.1} parent=55 // pred_fallthru
          _
        %s1413 = sand.u32 %s266, 1
        %s1414 = scalar_lea.sflag [#allocation6], %s1413
        %s1415 = sand.u32 %s266, 1
        %s1416 = smul.addr %s1415, 128
        %s1417 = scalar_lea.vmem [#allocation18], %s1416
        // Predicated region
        $region97: #{tpu_custom_call.1} parent=55 // pred_check
          %p1418 = pneg %p276
        $region98: #{tpu_custom_call.1} parent=55 // pred_check_branch
          %1420 = sbr.rel (%p1418) target = $region100
        $region99: #{tpu_custom_call.1} parent=55 // pred_region
          %s1421 = smul.u32 16, %s39
          %s1423 = ssub.s32 2048, 2048
          %1424 = vsyncadd %s1414, %s1423
          %s1425 = smul.addr %s1421, 128
          %s1426 = scalar_lea.hbm %s9, %s1425
          %s1427 = sshll.u32 %s1417, 4
          %s1428 = int_to_ptr.vmem [resolvable:$true] %s1427
          %1433 = dma.vmem_to_hbm [thread:$0]  %s1428, 2048, %s1426, %s1414, 128, 128, 8
        $region100: #{tpu_custom_call.1} parent=55 // pred_fallthru
          _
      $region56: #{tpu_custom_call.1} parent=5 // pred_fallthru
        _
      %p1434 = scmp.le.s32.totalorder 2, %s30
      // Predicated region
      $region101: #{tpu_custom_call.1} parent=5 // pred_check
        %p1435 = pneg %p1434
      $region102: #{tpu_custom_call.1} parent=5 // pred_check_branch
        %1437 = sbr.rel (%p1435) target = $region104
      $region103: #{tpu_custom_call.1} parent=5 // pred_region
        %s1438 = ssub.s32 %s30, 2
        // Predicated region
        $region105: #{tpu_custom_call.1} parent=103 // pred_check
          %p1439 = pneg %p282
        $region106: #{tpu_custom_call.1} parent=103 // pred_check_branch
          %1441 = sbr.rel (%p1439) target = $region108
        $region107: #{tpu_custom_call.1} parent=103 // pred_region
          %s1442 = sand.u32 %s267, 1
          %s1443 = scalar_lea.sflag [#allocation6], %s1442
          %s1444 = sand.u32 %s267, 1
          %s1445 = smul.addr %s1444, 128
          %s1446 = scalar_lea.vmem [#allocation18], %s1445
          %1447 = dma.done %s1443, 2048
        $region108: #{tpu_custom_call.1} parent=103 // pred_fallthru
          _
      $region104: #{tpu_custom_call.1} parent=5 // pred_fallthru
        _
    $region6: #{tpu_custom_call.1} parent=1 // loop_footer
      %s34 = sadd.s32 1, %s30
    $region7: #{tpu_custom_call.1} parent=1 // loop_footer_branch
      %29 = sbr.rel target = $region3
    $region8: #{tpu_custom_call.1} parent=1 // loop_exit
      _
    %1448 = vsyncpa [#allocation5], 1
    %s1449 = scalar_lea.sflag [#allocation5], 1
    %1450 = vsyncpa %s1449, 1
    %1451 = vsyncpa [#allocation8], 1
    %s1452 = scalar_lea.sflag [#allocation8], 1
    %1453 = vsyncpa %s1452, 1
    %1454 = vsyncpa [#allocation11], 1
    %s1455 = scalar_lea.sflag [#allocation11], 1
    %1456 = vsyncpa %s1455, 1
    %1457 = vsyncpa [#allocation14], 1
    %1458 = vsyncpa [#allocation17], 1
    %1459 = vsyncpa [#allocation6], 1
    %s1460 = scalar_lea.sflag [#allocation6], 1
    %1461 = vsyncpa %s1460, 1

</llo_original>
